<compile_context>
chip_gen: v7x
topology: tpu7x:2x2x1
jax: 0.10.0
libtpu: 0.0.40
codegen_flags: <defaults>
</compile_context>

<pallas_src>
import functools

import jax
import jax.numpy as jnp
from jax.experimental import pallas as pl
from jax.experimental.pallas import tpu as pltpu

ALPHA = 0.5
BETA = 0.1
EPS = 1e-8


def _round_up(x, m):
    return ((x + m - 1) // m) * m


def _cdiv(a, b):
    return -(-a // b)


def fusion_loss_kernel(*args, num_feats, inv_rows, total_rows, tile_rows,
                       need_mask):
    """args = (outputs_ref, labels_ref, feat_ref_0..K-1, attn_tile_ref,
               out_ref, acc_ref)."""
    outputs_ref, labels_ref = args[0], args[1]
    feat_refs = args[2:2 + num_feats]
    attn_ref = args[2 + num_feats]
    out_ref = args[3 + num_feats]
    acc_ref = args[4 + num_feats]

    c = pl.program_id(0)          # slice index (parallel -> one per v7x core)
    t = pl.program_id(1)          # streamed tile within the slice (reduction)
    nt = pl.num_programs(1)

    # ---- per-slice init: zero accumulator + this slice's output row ----
    @pl.when(t == 0)
    def _init():
        acc_ref[...] = jnp.zeros_like(acc_ref)
        out_ref[0, 0] = jnp.float32(0.0)
        out_ref[0, 1] = jnp.float32(0.0)
        out_ref[0, 3] = jnp.float32(0.0)

    # ---- CE + feature consistency: once, on slice 0, at step 0 (overlaps the
    #      DMAs of tiles 1..n instead of landing in the pipeline epilogue) ----
    @pl.when(jnp.logical_and(t == 0, c == 0))
    def _ce_cons():
        # cross entropy (mean over batch)
        logits = outputs_ref[...].astype(jnp.float32)          # [B, C]
        bsz, ncls = logits.shape
        m = jnp.max(logits, axis=1, keepdims=True)
        shifted = logits - m
        lse = jnp.log(jnp.sum(jnp.exp(shifted), axis=1, keepdims=True))
        logp = shifted - lse                                   # [B, C]
        labels = labels_ref[...]                               # [B, 1] int32
        cls_ids = jax.lax.broadcasted_iota(jnp.int32, (bsz, ncls), 1)
        onehot = (cls_ids == labels).astype(jnp.float32)
        ce = -jnp.sum(onehot * logp) / bsz

        # feature consistency: pairwise cosine-similarity variance (ddof=1).
        # Norms hoisted out of the pair loop; rsqrt instead of sqrt + divides.
        normed = []
        for k in range(num_feats):
            x = feat_refs[k][...].astype(jnp.float32)          # [B, D]
            nsq = jnp.sum(x * x, axis=1, keepdims=True)        # [B, 1]
            inv_n = jax.lax.rsqrt(jnp.maximum(nsq, jnp.float32(EPS * EPS)))
            normed.append(x * inv_n)
        # torch.var default is unbiased -> NaN at B == 1; mirror that.
        inv_ddof = (jnp.float32(1.0 / (bsz - 1)) if bsz > 1
                    else jnp.float32(jnp.nan))
        cons = jnp.float32(0.0)
        # TODO(synk): for large D or K, replace this O(K^2) VPU loop with one
        # [B,K,D]x[B,K,D]->[B,K,K] MXU contraction.
        for i in range(num_feats):
            for j in range(i + 1, num_feats):
                sim = jnp.sum(normed[i] * normed[j], axis=1, keepdims=True)
                mean = jnp.sum(sim) / bsz
                cons = cons + jnp.sum((sim - mean) ** 2) * inv_ddof
        cons = cons / num_feats

        out_ref[0, 0] = ce
        out_ref[0, 1] = cons

    # ---- streaming attention sum-of-squares (accumulated across t) ----
    a = attn_ref[...].astype(jnp.float32)                      # [tile_rows, S]
    if need_mask:
        # Unclamped global row index: the clamped (redundant) trailing block
        # and the padded part of the ragged last block both land >= total_rows
        # and are zeroed *before* squaring.
        start = (c * nt + t) * tile_rows
        rows = start + jax.lax.broadcasted_iota(jnp.int32, (tile_rows, 1), 0)
        a = jnp.where(rows < total_rows, a, jnp.float32(0.0))
    acc_ref[...] += jnp.sum(a * a, axis=0, keepdims=True)      # [1, S]

    @pl.when(t == nt - 1)
    def _finalize():
        out_ref[0, 2] = jnp.sum(acc_ref[...]) * jnp.float32(inv_rows)


def hierarchical_fusion_loss(outputs, labels, feat_list, attn_weights,
                             *, target_tile_bytes=4 * 1024 * 1024):
    """JAX/Pallas equivalent of HierarchicalFusionLoss.forward.

    outputs:      [B, C] logits (any float dtype)
    labels:       [B] int class ids
    feat_list:    list of K arrays, each [B, D]  (the feat_dict values)
    attn_weights: [..., S]
    """
    num_feats = len(feat_list)
    bsz, ncls = outputs.shape
    labels2d = labels.reshape(bsz, 1).astype(jnp.int32)

    # ---- layout-preserving view: collapse leading dims only (no relayout) ----
    s = int(attn_weights.shape[-1])
    attn2d = attn_weights.reshape(-1, s)
    n_rows = int(attn2d.shape[0])               # divisor for the mean
    itemsize = attn2d.dtype.itemsize
    bytes_per_row = max(1, s * itemsize)

    # ---- streamed-tile sizing: ~target_tile_bytes per tile (rows mult. of 8) ----
    max_tile_rows = max(8, (int(target_tile_bytes) // bytes_per_row) // 8 * 8)
    if n_rows <= max_tile_rows:
        tile_rows, n_blocks = n_rows, 1          # full-extent block (always legal)
    else:
        tile_rows = max_tile_rows
        n_blocks = _cdiv(n_rows, tile_rows)
    num_split = 2 if n_blocks >= 2 else 1        # feed both v7x TensorCores
    nt = _cdiv(n_blocks, num_split)
    need_mask = (num_split * nt * tile_rows) != n_rows

    kern = functools.partial(
        fusion_loss_kernel,
        num_feats=num_feats,
        inv_rows=1.0 / float(n_rows),
        total_rows=n_rows,
        tile_rows=tile_rows,
        need_mask=need_mask,
    )

    const = lambda c, t: (0, 0)
    # Clamp so a (possible) redundant trailing block never indexes past the
    # array; its contribution is removed by the in-kernel row mask.
    attn_map = lambda c, t: (jnp.minimum(c * nt + t, n_blocks - 1), 0)

    in_specs = [pl.BlockSpec((bsz, ncls), const),        # logits (resident)
                pl.BlockSpec((bsz, 1), const)]           # labels (resident)
    in_specs += [pl.BlockSpec(tuple(f.shape), const) for f in feat_list]
    in_specs.append(pl.BlockSpec((tile_rows, s), attn_map))   # streamed

    # ---- right-sized VMEM budget (double-buffered tile + residents + scratch) ----
    def _vmem_bytes(shape, isz):
        shape = tuple(int(d) for d in shape)
        lead = 1
        for d in shape[:-2]:
            lead *= d
        r = _round_up(shape[-2], 8) if len(shape) >= 2 else 1
        c = _round_up(shape[-1], 128)
        return lead * r * c * isz

    vmem_need = 2 * _vmem_bytes((tile_rows, s), itemsize)
    vmem_need += 2 * (_vmem_bytes((bsz, ncls), outputs.dtype.itemsize)
                      + _vmem_bytes((bsz, 1), 4)
                      + sum(_vmem_bytes(f.shape, f.dtype.itemsize)
                            for f in feat_list))
    vmem_need += _vmem_bytes((1, s), 4)
    vmem_limit = int(max(vmem_need + 4 * 1024 * 1024, 16 * 1024 * 1024))

    out = pl.pallas_call(
        kern,
        grid=(num_split, nt),
        in_specs=in_specs,
        out_specs=pl.BlockSpec((1, 4), lambda c, t: (c, 0),
                               memory_space=pltpu.SMEM),
        out_shape=jax.ShapeDtypeStruct((num_split, 4), jnp.float32),
        scratch_shapes=[pltpu.VMEM((1, s), jnp.float32)],
        compiler_params=pltpu.CompilerParams(
            dimension_semantics=("parallel", "arbitrary"),
            vmem_limit_bytes=vmem_limit),
    )(outputs, labels2d, *feat_list, attn2d)

    ce = out[0, 0]
    cons = out[0, 1]
    spar = jnp.sum(out[:, 2])                    # combine per-slice partials
    total = ce + ALPHA * cons + BETA * spar
    return {"total": total, "ce": ce, "consistency": cons, "sparsity": spar}


def _reference_loss(outputs, labels, feat_list, attn_weights):
    """Pure-JAX reference mirroring the PyTorch module (for verification)."""
    logp = jax.nn.log_softmax(outputs, axis=1)
    ce = -jnp.mean(logp[jnp.arange(outputs.shape[0]), labels])
    k = len(feat_list)
    cons = jnp.float32(0.0)
    for i in range(k):
        for j in range(i + 1, k):
            xi, xj = feat_list[i], feat_list[j]
            ni = jnp.maximum(jnp.linalg.norm(xi, axis=1), EPS)
            nj = jnp.maximum(jnp.linalg.norm(xj, axis=1), EPS)
            sim = jnp.sum(xi * xj, axis=1) / (ni * nj)
            cons = cons + jnp.var(sim, ddof=1)
    cons = cons / k
    spar = jnp.mean(jnp.sum(attn_weights ** 2, axis=-1))
    total = ce + ALPHA * cons + BETA * spar
    return total, ce, cons, spar


if __name__ == "__main__":
    key = jax.random.PRNGKey(0)
    k_out, k_lab, k_f1, k_f2, k_f3, k_a1, k_a2 = jax.random.split(key, 7)

    B, C, D = 8, 16, 32
    outputs = jax.random.normal(k_out, (B, C), dtype=jnp.float32)
    labels = jax.random.randint(k_lab, (B,), 0, C, dtype=jnp.int32)
    feat_list = [
        jax.random.normal(k_f1, (B, D), dtype=jnp.float32),
        jax.random.normal(k_f2, (B, D), dtype=jnp.float32),
        jax.random.normal(k_f3, (B, D), dtype=jnp.float32),
    ]

    # Case 1: default ~4 MiB tile target -> single resident tile.
    attn1 = jax.nn.softmax(
        jax.random.normal(k_a1, (4, 8, 64, 64), dtype=jnp.float32), axis=-1)
    # Case 2: small tile target -> multi-tile streaming, 2-slice split, ragged
    # last block (exercises the index-map clamp + in-kernel row mask).
    attn2 = jax.nn.softmax(
        jax.random.normal(k_a2, (2, 4, 100, 48), dtype=jnp.float32), axis=-1)

    for attn, tgt in ((attn1, 4 * 1024 * 1024), (attn2, 64 * 1024)):
        result = hierarchical_fusion_loss(outputs, labels, feat_list, attn,
                                          target_tile_bytes=tgt)
        jax.block_until_ready(result)

        ref_total, ref_ce, ref_cons, ref_spar = _reference_loss(
            outputs, labels, feat_list, attn)
        assert jnp.allclose(result["total"], ref_total, atol=1e-5, rtol=1e-5), (
            result["total"], ref_total)
        assert jnp.allclose(result["ce"], ref_ce, atol=1e-5, rtol=1e-5), (
            result["ce"], ref_ce)
        assert jnp.allclose(result["consistency"], ref_cons, atol=1e-5,
                            rtol=1e-5), (result["consistency"], ref_cons)
        assert jnp.allclose(result["sparsity"], ref_spar, atol=1e-5,
                            rtol=1e-5), (result["sparsity"], ref_spar)

    print("KERNEL_OK")
</pallas_src>

<mosaic_0001>
module attributes {stable_mosaic.version = 11 : i64} {
  func.func @fusion_loss_kernel(%arg0: i32, %arg1: i32, %arg2: memref<8x16xf32, #tpu.memory_space<vmem>>, %arg3: memref<8x1xi32, #tpu.memory_space<vmem>>, %arg4: memref<8x32xf32, #tpu.memory_space<vmem>>, %arg5: memref<8x32xf32, #tpu.memory_space<vmem>>, %arg6: memref<8x32xf32, #tpu.memory_space<vmem>>, %arg7: memref<2048x64xf32, #tpu.memory_space<vmem>>, %arg8: memref<1x4xf32, #tpu.memory_space<smem>>, %arg9: memref<1x64xf32, #tpu.memory_space<vmem>>) attributes {dimension_semantics = [#tpu.dimension_semantics<parallel>, #tpu.dimension_semantics<arbitrary>], iteration_bounds = array<i64: 1, 1>, scalar_prefetch = 0 : i64, scratch_operands = 1 : i64, tpu.core_type = #tpu.core_type<tc>, window_params = [{pipeline_mode = #tpu.pipeline_mode<synchronous>, transform_indices = @transform_0, window_bounds = array<i64: 8, 16>}, {pipeline_mode = #tpu.pipeline_mode<synchronous>, transform_indices = @transform_1, window_bounds = array<i64: 8, 1>}, {pipeline_mode = #tpu.pipeline_mode<synchronous>, transform_indices = @transform_2, window_bounds = array<i64: 8, 32>}, {pipeline_mode = #tpu.pipeline_mode<synchronous>, transform_indices = @transform_3, window_bounds = array<i64: 8, 32>}, {pipeline_mode = #tpu.pipeline_mode<synchronous>, transform_indices = @transform_4, window_bounds = array<i64: 8, 32>}, {transform_indices = @transform_5, window_bounds = array<i64: 2048, 64>}, {transform_indices = @transform_6, window_bounds = array<i64: 1, 4>}]} {
    %c0_i32 = arith.constant 0 : i32
    %0 = arith.cmpi eq, %arg1, %c0_i32 : i32
    %1 = arith.extui %0 : i1 to i32
    %c0_i32_0 = arith.constant 0 : i32
    %2 = arith.cmpi ne, %1, %c0_i32_0 : i32
    scf.if %2 {
      %cst_11 = arith.constant 0.000000e+00 : f32
      %18 = vector.broadcast %cst_11 : f32 to vector<1x64xf32>
      %c0_12 = arith.constant 0 : index
      %c0_13 = arith.constant 0 : index
      %19 = vector.load %arg9[%c0_12, %c0_13] : memref<1x64xf32, #tpu.memory_space<vmem>>, vector<1x64xf32>
      tpu.vector_store %arg9[%c0_12, %c0_13], %18 {strides = array<i32>} : memref<1x64xf32, #tpu.memory_space<vmem>>, vector<1x64xf32>,
      %cst_14 = arith.constant 0.000000e+00 : f32
      %c0_15 = arith.constant 0 : index
      %c0_16 = arith.constant 0 : index
      %20 = memref.load %arg8[%c0_15, %c0_16] : memref<1x4xf32, #tpu.memory_space<smem>>
      memref.store %cst_14, %arg8[%c0_15, %c0_16] : memref<1x4xf32, #tpu.memory_space<smem>>
      %cst_17 = arith.constant 0.000000e+00 : f32
      %c0_18 = arith.constant 0 : index
      %c1 = arith.constant 1 : index
      %21 = memref.load %arg8[%c0_18, %c1] : memref<1x4xf32, #tpu.memory_space<smem>>
      memref.store %cst_17, %arg8[%c0_18, %c1] : memref<1x4xf32, #tpu.memory_space<smem>>
      %cst_19 = arith.constant 0.000000e+00 : f32
      %c0_20 = arith.constant 0 : index
      %c3 = arith.constant 3 : index
      %22 = memref.load %arg8[%c0_20, %c3] : memref<1x4xf32, #tpu.memory_space<smem>>
      memref.store %cst_19, %arg8[%c0_20, %c3] : memref<1x4xf32, #tpu.memory_space<smem>>
    } else {
    }
    %c0_i32_1 = arith.constant 0 : i32
    %3 = arith.cmpi eq, %arg1, %c0_i32_1 : i32
    %c0_i32_2 = arith.constant 0 : i32
    %4 = arith.cmpi eq, %arg0, %c0_i32_2 : i32
    %5 = arith.andi %3, %4 : i1
    %6 = arith.extui %5 : i1 to i32
    %c0_i32_3 = arith.constant 0 : i32
    %7 = arith.cmpi ne, %6, %c0_i32_3 : i32
    scf.if %7 {
      %c0_11 = arith.constant 0 : index
      %c0_12 = arith.constant 0 : index
      %18 = vector.load %arg2[%c0_11, %c0_12] : memref<8x16xf32, #tpu.memory_space<vmem>>, vector<8x16xf32>
      %cst_13 = arith.constant dense<0xFF800000> : vector<8xf32>
      %19 = vector.multi_reduction <maximumf>, %18, %cst_13 [1] : vector<8x16xf32> to vector<8xf32>
      %20 = vector.shape_cast %19 : vector<8xf32> to vector<8x1xf32>
      %21 = vector.broadcast %20 : vector<8x1xf32> to vector<8x16xf32>
      %22 = arith.subf %18, %21 : vector<8x16xf32>
      %23 = math.exp %22 : vector<8x16xf32>
      %cst_14 = arith.constant dense<0.000000e+00> : vector<8xf32>
      %24 = vector.multi_reduction <add>, %23, %cst_14 [1] : vector<8x16xf32> to vector<8xf32>
      %25 = vector.shape_cast %24 : vector<8xf32> to vector<8x1xf32>
      %26 = math.log %25 : vector<8x1xf32>
      %27 = vector.broadcast %26 : vector<8x1xf32> to vector<8x16xf32>
      %28 = arith.subf %22, %27 : vector<8x16xf32>
      %c0_15 = arith.constant 0 : index
      %c0_16 = arith.constant 0 : index
      %29 = vector.load %arg3[%c0_15, %c0_16] : memref<8x1xi32, #tpu.memory_space<vmem>>, vector<8x1xi32>
      %30 = tpu.iota {dimensions = array<i32: 1>} : vector<8x16xi32>
      %31 = vector.broadcast %29 : vector<8x1xi32> to vector<8x16xi32>
      %32 = arith.cmpi eq, %30, %31 : vector<8x16xi32>
      %33 = arith.extui %32 : vector<8x16xi1> to vector<8x16xi32>
      %34 = arith.sitofp %33 : vector<8x16xi32> to vector<8x16xf32>
      %35 = arith.mulf %34, %28 : vector<8x16xf32>
      %36 = vector.shape_cast %35 : vector<8x16xf32> to vector<1x8x16xf32>
      %cst_17 = arith.constant dense<0.000000e+00> : vector<1xf32>
      %37 = vector.multi_reduction <add>, %36, %cst_17 [1, 2] : vector<1x8x16xf32> to vector<1xf32>
      %38 = vector.shape_cast %37 : vector<1xf32> to vector<1x1x1xf32>
      %39 = vector.extract %38[0, 0, 0] : f32 from vector<1x1x1xf32>
      %cst_18 = arith.constant 0.000000e+00 : f32
      %40 = arith.subf %cst_18, %39 : f32
      %cst_19 = arith.constant 8.000000e+00 : f32
      %41 = arith.divf %40, %cst_19 : f32
      %c0_20 = arith.constant 0 : index
      %c0_21 = arith.constant 0 : index
      %42 = vector.load %arg4[%c0_20, %c0_21] : memref<8x32xf32, #tpu.memory_space<vmem>>, vector<8x32xf32>
      %43 = arith.mulf %42, %42 : vector<8x32xf32>
      %cst_22 = arith.constant dense<0.000000e+00> : vector<8xf32>
      %44 = vector.multi_reduction <add>, %43, %cst_22 [1] : vector<8x32xf32> to vector<8xf32>
      %45 = vector.shape_cast %44 : vector<8xf32> to vector<8x1xf32>
      %cst_23 = arith.constant 1.000000e-16 : f32
      %46 = vector.broadcast %cst_23 : f32 to vector<8x1xf32>
      %47 = arith.maximumf %45, %46 : vector<8x1xf32>
      %48 = math.rsqrt %47 : vector<8x1xf32>
      %49 = vector.broadcast %48 : vector<8x1xf32> to vector<8x32xf32>
      %50 = arith.mulf %42, %49 : vector<8x32xf32>
      %c0_24 = arith.constant 0 : index
      %c0_25 = arith.constant 0 : index
      %51 = vector.load %arg5[%c0_24, %c0_25] : memref<8x32xf32, #tpu.memory_space<vmem>>, vector<8x32xf32>
      %52 = arith.mulf %51, %51 : vector<8x32xf32>
      %cst_26 = arith.constant dense<0.000000e+00> : vector<8xf32>
      %53 = vector.multi_reduction <add>, %52, %cst_26 [1] : vector<8x32xf32> to vector<8xf32>
      %54 = vector.shape_cast %53 : vector<8xf32> to vector<8x1xf32>
      %cst_27 = arith.constant 1.000000e-16 : f32
      %55 = vector.broadcast %cst_27 : f32 to vector<8x1xf32>
      %56 = arith.maximumf %54, %55 : vector<8x1xf32>
      %57 = math.rsqrt %56 : vector<8x1xf32>
      %58 = vector.broadcast %57 : vector<8x1xf32> to vector<8x32xf32>
      %59 = arith.mulf %51, %58 : vector<8x32xf32>
      %c0_28 = arith.constant 0 : index
      %c0_29 = arith.constant 0 : index
      %60 = vector.load %arg6[%c0_28, %c0_29] : memref<8x32xf32, #tpu.memory_space<vmem>>, vector<8x32xf32>
      %61 = arith.mulf %60, %60 : vector<8x32xf32>
      %cst_30 = arith.constant dense<0.000000e+00> : vector<8xf32>
      %62 = vector.multi_reduction <add>, %61, %cst_30 [1] : vector<8x32xf32> to vector<8xf32>
      %63 = vector.shape_cast %62 : vector<8xf32> to vector<8x1xf32>
      %cst_31 = arith.constant 1.000000e-16 : f32
      %64 = vector.broadcast %cst_31 : f32 to vector<8x1xf32>
      %65 = arith.maximumf %63, %64 : vector<8x1xf32>
      %66 = math.rsqrt %65 : vector<8x1xf32>
      %67 = vector.broadcast %66 : vector<8x1xf32> to vector<8x32xf32>
      %68 = arith.mulf %60, %67 : vector<8x32xf32>
      %69 = arith.mulf %50, %59 : vector<8x32xf32>
      %cst_32 = arith.constant dense<0.000000e+00> : vector<8xf32>
      %70 = vector.multi_reduction <add>, %69, %cst_32 [1] : vector<8x32xf32> to vector<8xf32>
      %71 = vector.shape_cast %70 : vector<8xf32> to vector<8x1xf32>
      %72 = vector.shape_cast %71 : vector<8x1xf32> to vector<1x8x1xf32>
      %cst_33 = arith.constant dense<0.000000e+00> : vector<1xf32>
      %73 = vector.multi_reduction <add>, %72, %cst_33 [1, 2] : vector<1x8x1xf32> to vector<1xf32>
      %74 = vector.shape_cast %73 : vector<1xf32> to vector<1x1x1xf32>
      %75 = vector.extract %74[0, 0, 0] : f32 from vector<1x1x1xf32>
      %cst_34 = arith.constant 8.000000e+00 : f32
      %76 = arith.divf %75, %cst_34 : f32
      %77 = vector.broadcast %76 : f32 to vector<8x1xf32>
      %78 = arith.subf %71, %77 : vector<8x1xf32>
      %79 = arith.mulf %78, %78 : vector<8x1xf32>
      %80 = vector.shape_cast %79 : vector<8x1xf32> to vector<1x8x1xf32>
      %cst_35 = arith.constant dense<0.000000e+00> : vector<1xf32>
      %81 = vector.multi_reduction <add>, %80, %cst_35 [1, 2] : vector<1x8x1xf32> to vector<1xf32>
      %82 = vector.shape_cast %81 : vector<1xf32> to vector<1x1x1xf32>
      %83 = vector.extract %82[0, 0, 0] : f32 from vector<1x1x1xf32>
      %cst_36 = arith.constant 0.142857149 : f32
      %84 = arith.mulf %83, %cst_36 : f32
      %cst_37 = arith.constant 0.000000e+00 : f32
      %85 = arith.addf %cst_37, %84 : f32
      %86 = arith.mulf %50, %68 : vector<8x32xf32>
      %cst_38 = arith.constant dense<0.000000e+00> : vector<8xf32>
      %87 = vector.multi_reduction <add>, %86, %cst_38 [1] : vector<8x32xf32> to vector<8xf32>
      %88 = vector.shape_cast %87 : vector<8xf32> to vector<8x1xf32>
      %89 = vector.shape_cast %88 : vector<8x1xf32> to vector<1x8x1xf32>
      %cst_39 = arith.constant dense<0.000000e+00> : vector<1xf32>
      %90 = vector.multi_reduction <add>, %89, %cst_39 [1, 2] : vector<1x8x1xf32> to vector<1xf32>
      %91 = vector.shape_cast %90 : vector<1xf32> to vector<1x1x1xf32>
      %92 = vector.extract %91[0, 0, 0] : f32 from vector<1x1x1xf32>
      %cst_40 = arith.constant 8.000000e+00 : f32
      %93 = arith.divf %92, %cst_40 : f32
      %94 = vector.broadcast %93 : f32 to vector<8x1xf32>
      %95 = arith.subf %88, %94 : vector<8x1xf32>
      %96 = arith.mulf %95, %95 : vector<8x1xf32>
      %97 = vector.shape_cast %96 : vector<8x1xf32> to vector<1x8x1xf32>
      %cst_41 = arith.constant dense<0.000000e+00> : vector<1xf32>
      %98 = vector.multi_reduction <add>, %97, %cst_41 [1, 2] : vector<1x8x1xf32> to vector<1xf32>
      %99 = vector.shape_cast %98 : vector<1xf32> to vector<1x1x1xf32>
      %100 = vector.extract %99[0, 0, 0] : f32 from vector<1x1x1xf32>
      %cst_42 = arith.constant 0.142857149 : f32
      %101 = arith.mulf %100, %cst_42 : f32
      %102 = arith.addf %85, %101 : f32
      %103 = arith.mulf %59, %68 : vector<8x32xf32>
      %cst_43 = arith.constant dense<0.000000e+00> : vector<8xf32>
      %104 = vector.multi_reduction <add>, %103, %cst_43 [1] : vector<8x32xf32> to vector<8xf32>
      %105 = vector.shape_cast %104 : vector<8xf32> to vector<8x1xf32>
      %106 = vector.shape_cast %105 : vector<8x1xf32> to vector<1x8x1xf32>
      %cst_44 = arith.constant dense<0.000000e+00> : vector<1xf32>
      %107 = vector.multi_reduction <add>, %106, %cst_44 [1, 2] : vector<1x8x1xf32> to vector<1xf32>
      %108 = vector.shape_cast %107 : vector<1xf32> to vector<1x1x1xf32>
      %109 = vector.extract %108[0, 0, 0] : f32 from vector<1x1x1xf32>
      %cst_45 = arith.constant 8.000000e+00 : f32
      %110 = arith.divf %109, %cst_45 : f32
      %111 = vector.broadcast %110 : f32 to vector<8x1xf32>
      %112 = arith.subf %105, %111 : vector<8x1xf32>
      %113 = arith.mulf %112, %112 : vector<8x1xf32>
      %114 = vector.shape_cast %113 : vector<8x1xf32> to vector<1x8x1xf32>
      %cst_46 = arith.constant dense<0.000000e+00> : vector<1xf32>
      %115 = vector.multi_reduction <add>, %114, %cst_46 [1, 2] : vector<1x8x1xf32> to vector<1xf32>
      %116 = vector.shape_cast %115 : vector<1xf32> to vector<1x1x1xf32>
      %117 = vector.extract %116[0, 0, 0] : f32 from vector<1x1x1xf32>
      %cst_47 = arith.constant 0.142857149 : f32
      %118 = arith.mulf %117, %cst_47 : f32
      %119 = arith.addf %102, %118 : f32
      %cst_48 = arith.constant 3.000000e+00 : f32
      %120 = arith.divf %119, %cst_48 : f32
      %c0_49 = arith.constant 0 : index
      %c0_50 = arith.constant 0 : index
      %121 = memref.load %arg8[%c0_49, %c0_50] : memref<1x4xf32, #tpu.memory_space<smem>>
      memref.store %41, %arg8[%c0_49, %c0_50] : memref<1x4xf32, #tpu.memory_space<smem>>
      %c0_51 = arith.constant 0 : index
      %c1 = arith.constant 1 : index
      %122 = memref.load %arg8[%c0_51, %c1] : memref<1x4xf32, #tpu.memory_space<smem>>
      memref.store %120, %arg8[%c0_51, %c1] : memref<1x4xf32, #tpu.memory_space<smem>>
    } else {
    }
    %c0 = arith.constant 0 : index
    %c0_4 = arith.constant 0 : index
    %8 = vector.load %arg7[%c0, %c0_4] : memref<2048x64xf32, #tpu.memory_space<vmem>>, vector<2048x64xf32>
    %c0_5 = arith.constant 0 : index
    %c0_6 = arith.constant 0 : index
    %9 = vector.load %arg9[%c0_5, %c0_6] : memref<1x64xf32, #tpu.memory_space<vmem>>, vector<1x64xf32>
    %10 = arith.mulf %8, %8 : vector<2048x64xf32>
    %cst = arith.constant dense<0.000000e+00> : vector<64xf32>
    %11 = vector.multi_reduction <add>, %10, %cst [0] : vector<2048x64xf32> to vector<64xf32>
    %12 = vector.shape_cast %11 : vector<64xf32> to vector<1x64xf32>
    %13 = arith.addf %9, %12 : vector<1x64xf32>
    %c0_7 = arith.constant 0 : index
    %c0_8 = arith.constant 0 : index
    %14 = vector.load %arg9[%c0_7, %c0_8] : memref<1x64xf32, #tpu.memory_space<vmem>>, vector<1x64xf32>
    tpu.vector_store %arg9[%c0_7, %c0_8], %13 {strides = array<i32>} : memref<1x64xf32, #tpu.memory_space<vmem>>, vector<1x64xf32>,
    %c0_i32_9 = arith.constant 0 : i32
    %15 = arith.cmpi eq, %arg1, %c0_i32_9 : i32
    %16 = arith.extui %15 : i1 to i32
    %c0_i32_10 = arith.constant 0 : i32
    %17 = arith.cmpi ne, %16, %c0_i32_10 : i32
    scf.if %17 {
      %c0_11 = arith.constant 0 : index
      %c0_12 = arith.constant 0 : index
      %18 = vector.load %arg9[%c0_11, %c0_12] : memref<1x64xf32, #tpu.memory_space<vmem>>, vector<1x64xf32>
      %19 = vector.shape_cast %18 : vector<1x64xf32> to vector<1x1x64xf32>
      %cst_13 = arith.constant dense<0.000000e+00> : vector<1xf32>
      %20 = vector.multi_reduction <add>, %19, %cst_13 [1, 2] : vector<1x1x64xf32> to vector<1xf32>
      %21 = vector.shape_cast %20 : vector<1xf32> to vector<1x1x1xf32>
      %22 = vector.extract %21[0, 0, 0] : f32 from vector<1x1x1xf32>
      %cst_14 = arith.constant 4.8828125E-4 : f32
      %23 = arith.mulf %22, %cst_14 : f32
      %c0_15 = arith.constant 0 : index
      %c2 = arith.constant 2 : index
      %24 = memref.load %arg8[%c0_15, %c2] : memref<1x4xf32, #tpu.memory_space<smem>>
      memref.store %23, %arg8[%c0_15, %c2] : memref<1x4xf32, #tpu.memory_space<smem>>
    } else {
    }
    return
  }
  func.func @transform_0(%arg0: i32, %arg1: i32) -> (i32, i32) {
    %c0_i32 = arith.constant 0 : i32
    %c0_i32_0 = arith.constant 0 : i32
    %c0_i32_1 = arith.constant 0 : i32
    return %c0_i32, %c0_i32_0 : i32, i32
  }
  func.func @transform_1(%arg0: i32, %arg1: i32) -> (i32, i32) {
    %c0_i32 = arith.constant 0 : i32
    %c0_i32_0 = arith.constant 0 : i32
    %c0_i32_1 = arith.constant 0 : i32
    return %c0_i32, %c0_i32_0 : i32, i32
  }
  func.func @transform_2(%arg0: i32, %arg1: i32) -> (i32, i32) {
    %c0_i32 = arith.constant 0 : i32
    %c0_i32_0 = arith.constant 0 : i32
    %c0_i32_1 = arith.constant 0 : i32
    return %c0_i32, %c0_i32_0 : i32, i32
  }
  func.func @transform_3(%arg0: i32, %arg1: i32) -> (i32, i32) {
    %c0_i32 = arith.constant 0 : i32
    %c0_i32_0 = arith.constant 0 : i32
    %c0_i32_1 = arith.constant 0 : i32
    return %c0_i32, %c0_i32_0 : i32, i32
  }
  func.func @transform_4(%arg0: i32, %arg1: i32) -> (i32, i32) {
    %c0_i32 = arith.constant 0 : i32
    %c0_i32_0 = arith.constant 0 : i32
    %c0_i32_1 = arith.constant 0 : i32
    return %c0_i32, %c0_i32_0 : i32, i32
  }
  func.func @transform_5(%arg0: i32, %arg1: i32) -> (i32, i32) {
    %c1_i32 = arith.constant 1 : i32
    %0 = arith.muli %arg0, %c1_i32 : i32
    %1 = arith.addi %0, %arg1 : i32
    %c0_i32 = arith.constant 0 : i32
    %2 = arith.minsi %1, %c0_i32 : i32
    %c0_i32_0 = arith.constant 0 : i32
    %c0_i32_1 = arith.constant 0 : i32
    return %2, %c0_i32_0 : i32, i32
  }
  func.func @transform_6(%arg0: i32, %arg1: i32) -> (i32, i32) {
    %c0_i32 = arith.constant 0 : i32
    %c0_i32_0 = arith.constant 0 : i32
    return %arg0, %c0_i32 : i32, i32
  }
}

</mosaic_0001>

<llo_original>
// kernel: tpu_custom_call.1
$region0: #{tpu_custom_call.1}
  #allocation0 [shape = 'u32[]', space=smem, size = 0x4, offset = 0x4, fixed_abs, tag = 'smem constant byte address 0x4 - core index']
  #allocation1 [shape = 'u32[144,128]{1,0:T(1,128)}', space=vmem, size = 0x12000, scoped, tag = 'internal scratch']
  #allocation2 [shape = 'f32[1,64]{1,0:T(1,128)}', space=vmem, size = 0x200, scoped, tag = 'scratch operand']
  %s0 = inlined_call_operand.vmem [shape: f32[8,16], index: 0, kind: input, shape index: {}]
  %s1 = inlined_call_operand.vmem [shape: s32[8,1], index: 1, kind: input, shape index: {}]
  %s2 = inlined_call_operand.vmem [shape: f32[8,32], index: 2, kind: input, shape index: {}]
  %s3 = inlined_call_operand.vmem [shape: f32[8,32], index: 3, kind: input, shape index: {}]
  %s4 = inlined_call_operand.vmem [shape: f32[8,32], index: 4, kind: input, shape index: {}]
  %s5 = inlined_call_operand.vmem [shape: f32[2048,64], index: 5, kind: input, shape index: {}]
  %s6 = inlined_call_operand.hbm [shape: f32[1,4], index: 6, kind: output, shape index: {}]
  %s7 = sld [smem:[#allocation0]]
  $region46: #{tpu_custom_call.1} parent=0
    _
  %s9 = ssub.s32 1, %s7
  %s10 = scalar_select 0, %s9, %s7
  $region1: #{tpu_custom_call.1} parent=0
    #allocation3 [shape = 'u8[512]{0}', space=smem, size = 0x200, scoped, tag = 'output window, operand 0, single buffered']
    #allocation4 [shape = 's32[1]{0}', space=sflag, size = 0x4, scoped, tag = 'scoped memory for tpu_custom_call.1']
    %11 = vsyncpa [#allocation4], 0
    // Predicated region
    $region2: #{tpu_custom_call.1} parent=1 // pred_check
      _
    $region3: #{tpu_custom_call.1} parent=1 // pred_check_branch
      %13 = sbr.rel (0) target = $region5
    $region4: #{tpu_custom_call.1} parent=1 // pred_region
      _
    $region5: #{tpu_custom_call.1} parent=1 // pred_fallthru
      _
    // Predicated region
    $region6: #{tpu_custom_call.1} parent=1 // pred_check
      _
    $region7: #{tpu_custom_call.1} parent=1 // pred_check_branch
      %15 = sbr.rel (0) target = $region9
    $region8: #{tpu_custom_call.1} parent=1 // pred_region
      _
    $region9: #{tpu_custom_call.1} parent=1 // pred_fallthru
      _
    // Predicated region
    $region10: #{tpu_custom_call.1} parent=1 // pred_check
      _
    $region11: #{tpu_custom_call.1} parent=1 // pred_check_branch
      %17 = sbr.rel (0) target = $region13
    $region12: #{tpu_custom_call.1} parent=1 // pred_region
      _
    $region13: #{tpu_custom_call.1} parent=1 // pred_fallthru
      _
    // Predicated region
    $region14: #{tpu_custom_call.1} parent=1 // pred_check
      _
    $region15: #{tpu_custom_call.1} parent=1 // pred_check_branch
      %19 = sbr.rel (0) target = $region17
    $region16: #{tpu_custom_call.1} parent=1 // pred_region
      _
    $region17: #{tpu_custom_call.1} parent=1 // pred_fallthru
      _
    // Predicated region
    $region18: #{tpu_custom_call.1} parent=1 // pred_check
      _
    $region19: #{tpu_custom_call.1} parent=1 // pred_check_branch
      %21 = sbr.rel (0) target = $region21
    $region20: #{tpu_custom_call.1} parent=1 // pred_region
      _
    $region21: #{tpu_custom_call.1} parent=1 // pred_fallthru
      _
    // Predicated region
    $region22: #{tpu_custom_call.1} parent=1 // pred_check
      _
    $region23: #{tpu_custom_call.1} parent=1 // pred_check_branch
      %23 = sbr.rel (0) target = $region25
    $region24: #{tpu_custom_call.1} parent=1 // pred_region
      %s24 = sadd.s32 0, 0
      %p25 = scmp.lt.s32.totalorder %s24, 0
      %s26 = scalar_select %p25, %s24, 0
      %s27 = smul.u32 256, %s26
      %p28 = scmp.lt.s32.totalorder %s27, 255
      %s29 = scalar_select %p28, %s27, 255
      %s30 = smul.addr %s29, 8
      %s31 = scalar_lea.vmem %s5, %s30
      %s32 = sadd.s32 0, 0
      %p33 = scmp.lt.s32.totalorder %s32, 0
      %s34 = scalar_select %p33, %s32, 0
      %s35 = smul.u32 256, %s34
    $region25: #{tpu_custom_call.1} parent=1 // pred_fallthru
      _
    %s36 = sadd.s32 0, 0
    %p37 = scmp.lt.s32.totalorder %s36, 0
    %s38 = scalar_select %p37, %s36, 0
    %s39 = smul.u32 256, %s38
    %p40 = scmp.lt.s32.totalorder %s39, 255
    %s41 = scalar_select %p40, %s39, 255
    %s42 = smul.addr %s41, 8
    %s43 = scalar_lea.vmem %s5, %s42
    %s44 = sadd.s32 0, 0
    %p45 = scmp.lt.s32.totalorder %s44, 0
    %s46 = scalar_select %p45, %s44, 0
    %s47 = smul.u32 256, %s46
    %p48 = scmp.lt.s32.totalorder %s47, 255
    %s49 = scalar_select %p48, %s47, 255
    %s50 = smul.addr %s49, 8
    %s51 = scalar_lea.vmem %s5, %s50
    %s52 = sadd.s32 0, 0
    %p53 = scmp.lt.s32.totalorder %s52, 0
    %s54 = scalar_select %p53, %s52, 0
    %s55 = smul.u32 256, %s54
    %p56 = scmp.eq.s32.totalorder 0, 0
    // Predicated region
    $region26: #{tpu_custom_call.1} parent=1 // pred_check
      %p57 = pneg %p56
    $region27: #{tpu_custom_call.1} parent=1 // pred_check_branch
      %59 = sbr.rel (%p57) target = $region29
    $region28: #{tpu_custom_call.1} parent=1 // pred_region
      %vm60 = vcmask 516096
      %61 = vst.msk [vmem:[#allocation2] sm:$0x1] %vm60, 0.0
      %s62 = scalar_lea.smem [#allocation3], 0
      %63 = sst [smem:[%s62]] 0.0
      %s64 = scalar_lea.smem [#allocation3], 1
      %65 = sst [smem:[%s64]] 0.0
      %s66 = scalar_lea.smem [#allocation3], 3
      %67 = sst [smem:[%s66]] 0.0
    $region29: #{tpu_custom_call.1} parent=1 // pred_fallthru
      _
    %p68 = scmp.eq.s32.totalorder 0, 0
    %p69 = pnand %p56, %p68
    %p70 = pneg %p69
    // Predicated region
    $region30: #{tpu_custom_call.1} parent=1 // pred_check
      _
    $region31: #{tpu_custom_call.1} parent=1 // pred_check_branch
      %72 = sbr.rel (%p69) target = $region33
    $region32: #{tpu_custom_call.1} parent=1 // pred_region
      %v73 = vld [vmem:[%s0] sm:$0xff]
      %vm74 = vcmask 130048
      %v75 = vsel %vm74, %v73, -inf
      %76 = vmax.xlane.f32.xlu0 %v75
      %v77 = vpop.xlane.xlu0 %76
      %v78 = vsub.f32 %v73, %v77
      %v79 = vmul.f32 %v78, 1.442695
      %v80 = vpow.pop %v79
      %v81 = vsel %vm74, %v80, 0.0
      %82 = vadd.xlane.f32.xlu0 %v81
      %v83 = vpop.xlane.xlu0 %82
      %v84 = vlog2.pop %v83
      %v85 = vmul.f32 %v84, 0.6931472
      %v86 = vsub.f32 %v78, %v85
      %v87 = vld [vmem:[%s1] sm:$0xff]
      %v88 = vlaneseq
      %v89 = vand.u32 %v88, 127
      %90 = vset.pattern.permute.xlu0 0
      %91 = vperm.xlu0 %90, %v87
      %v92 = vpop.permute.xlu0 %91
      %vm93 = vcmp.eq.s32.totalorder %v89, %v92
      %v94 = vsel %vm93, 1, 0
      %v95 = vcvt.s32.f32 %v94
      %v96 = vmul.f32 %v95, %v86
      %v97 = vsel %vm74, %v96, 0.0
      %98 = vadd.xlane.f32.xlu0 %v97
      %v99 = vpop.xlane.xlu0 %98
      %v100 = vrot.slane %v99, 4
      %v101 = vadd.f32 %v99, %v100
      %v102 = vrot.slane %v101, 2
      %v103 = vadd.f32 %v101, %v102
      %v104 = vrot.slane %v103, 1
      %v105 = vadd.f32 %v103, %v104
      %s106 = vtos %v105
      %s107 = ssub.f32 0.0, %s106
      %v108 = vrcp.pop 8.0
      %s109 = vtos %v108
      %s110 = smul.f32 %s107, %s109
      %v111 = vld [vmem:[%s2] sm:$0xff]
      %v112 = vmul.f32 %v111, %v111
      %vm113 = vcmask 261120
      %v114 = vsel %vm113, %v112, 0.0
      %115 = vadd.xlane.f32.xlu0 %v114
      %v116 = vpop.xlane.xlu0 %115
      %v117 = vmax.f32 %v116, 1e-16
      %v118 = vrsqrt.pop %v117
      %v119 = vmul.f32 %v111, %v118
      %v120 = vld [vmem:[%s3] sm:$0xff]
      %v121 = vmul.f32 %v120, %v120
      %v122 = vsel %vm113, %v121, 0.0
      %123 = vadd.xlane.f32.xlu0 %v122
      %v124 = vpop.xlane.xlu0 %123
      %v125 = vmax.f32 %v124, 1e-16
      %v126 = vrsqrt.pop %v125
      %v127 = vmul.f32 %v120, %v126
      %v128 = vld [vmem:[%s4] sm:$0xff]
      %v129 = vmul.f32 %v128, %v128
      %v130 = vsel %vm113, %v129, 0.0
      %131 = vadd.xlane.f32.xlu0 %v130
      %v132 = vpop.xlane.xlu0 %131
      %v133 = vmax.f32 %v132, 1e-16
      %v134 = vrsqrt.pop %v133
      %v135 = vmul.f32 %v128, %v134
      %v136 = vmul.f32 %v119, %v127
      %v137 = vsel %vm113, %v136, 0.0
      %138 = vadd.xlane.f32.xlu0 %v137
      %v139 = vpop.xlane.xlu0 %138
      %vm140 = vcmask 7168
      %v141 = vsel %vm140, %v139, 0.0
      %142 = vadd.xlane.f32.xlu0 %v141
      %v143 = vpop.xlane.xlu0 %142
      %v144 = vrot.slane %v143, 4
      %v145 = vadd.f32 %v143, %v144
      %v146 = vrot.slane %v145, 2
      %v147 = vadd.f32 %v145, %v146
      %v148 = vrot.slane %v147, 1
      %v149 = vadd.f32 %v147, %v148
      %s150 = vtos %v149
      %v151 = vrcp.pop 8.0
      %s152 = vtos %v151
      %s153 = smul.f32 %s150, %s152
      %v154 = vstv %s153
      %v155 = vsub.f32 %v139, %v154
      %v156 = vmul.f32 %v155, %v155
      %v157 = vsel %vm140, %v156, 0.0
      %158 = vadd.xlane.f32.xlu0 %v157
      %v159 = vpop.xlane.xlu0 %158
      %v160 = vrot.slane %v159, 4
      %v161 = vadd.f32 %v159, %v160
      %v162 = vrot.slane %v161, 2
      %v163 = vadd.f32 %v161, %v162
      %v164 = vrot.slane %v163, 1
      %v165 = vadd.f32 %v163, %v164
      %s166 = vtos %v165
      %s167 = smul.f32 %s166, 0.14285715
      %s168 = sadd.f32 %s167, 0.0
      %v169 = vmul.f32 %v119, %v135
      %v170 = vsel %vm113, %v169, 0.0
      %171 = vadd.xlane.f32.xlu0 %v170
      %v172 = vpop.xlane.xlu0 %171
      %v173 = vsel %vm140, %v172, 0.0
      %174 = vadd.xlane.f32.xlu0 %v173
      %v175 = vpop.xlane.xlu0 %174
      %v176 = vrot.slane %v175, 4
      %v177 = vadd.f32 %v175, %v176
      %v178 = vrot.slane %v177, 2
      %v179 = vadd.f32 %v177, %v178
      %v180 = vrot.slane %v179, 1
      %v181 = vadd.f32 %v179, %v180
      %s182 = vtos %v181
      %v183 = vrcp.pop 8.0
      %s184 = vtos %v183
      %s185 = smul.f32 %s182, %s184
      %v186 = vstv %s185
      %v187 = vsub.f32 %v172, %v186
      %v188 = vmul.f32 %v187, %v187
      %v189 = vsel %vm140, %v188, 0.0
      %190 = vadd.xlane.f32.xlu0 %v189
      %v191 = vpop.xlane.xlu0 %190
      %v192 = vrot.slane %v191, 4
      %v193 = vadd.f32 %v191, %v192
      %v194 = vrot.slane %v193, 2
      %v195 = vadd.f32 %v193, %v194
      %v196 = vrot.slane %v195, 1
      %v197 = vadd.f32 %v195, %v196
      %s198 = vtos %v197
      %s199 = smul.f32 %s198, 0.14285715
      %s200 = sadd.f32 %s168, %s199
      %v201 = vmul.f32 %v127, %v135
      %v202 = vsel %vm113, %v201, 0.0
      %203 = vadd.xlane.f32.xlu0 %v202
      %v204 = vpop.xlane.xlu0 %203
      %v205 = vsel %vm140, %v204, 0.0
      %206 = vadd.xlane.f32.xlu0 %v205
      %v207 = vpop.xlane.xlu0 %206
      %v208 = vrot.slane %v207, 4
      %v209 = vadd.f32 %v207, %v208
      %v210 = vrot.slane %v209, 2
      %v211 = vadd.f32 %v209, %v210
      %v212 = vrot.slane %v211, 1
      %v213 = vadd.f32 %v211, %v212
      %s214 = vtos %v213
      %v215 = vrcp.pop 8.0
      %s216 = vtos %v215
      %s217 = smul.f32 %s214, %s216
      %v218 = vstv %s217
      %v219 = vsub.f32 %v204, %v218
      %v220 = vmul.f32 %v219, %v219
      %v221 = vsel %vm140, %v220, 0.0
      %222 = vadd.xlane.f32.xlu0 %v221
      %v223 = vpop.xlane.xlu0 %222
      %v224 = vrot.slane %v223, 4
      %v225 = vadd.f32 %v223, %v224
      %v226 = vrot.slane %v225, 2
      %v227 = vadd.f32 %v225, %v226
      %v228 = vrot.slane %v227, 1
      %v229 = vadd.f32 %v227, %v228
      %s230 = vtos %v229
      %s231 = smul.f32 %s230, 0.14285715
      %s232 = sadd.f32 %s200, %s231
      %v233 = vrcp.pop 3.0
      %s234 = vtos %v233
      %s235 = smul.f32 %s232, %s234
      %s236 = scalar_lea.smem [#allocation3], 0
      %237 = sst [smem:[%s236]] %s110
      %s238 = scalar_lea.smem [#allocation3], 1
      %239 = sst [smem:[%s238]] %s235
    $region33: #{tpu_custom_call.1} parent=1 // pred_fallthru
      _
    %v240 = vld [vmem:[%s51] sm:$0xff]
    %v241 = vld [vmem:[%s51 + $0x8] sm:$0xff]
    %v242 = vld [vmem:[%s51 + $0x10] sm:$0xff]
    %v243 = vld [vmem:[%s51 + $0x18] sm:$0xff]
    %v244 = vld [vmem:[%s51 + $0x20] sm:$0xff]
    %v245 = vld [vmem:[%s51 + $0x28] sm:$0xff]
    %v246 = vld [vmem:[%s51 + $0x30] sm:$0xff]
    %v247 = vld [vmem:[%s51 + $0x38] sm:$0xff]
    %v248 = vld [vmem:[%s51 + $0x40] sm:$0xff]
    %v249 = vld [vmem:[%s51 + $0x48] sm:$0xff]
    %v250 = vld [vmem:[%s51 + $0x50] sm:$0xff]
    %v251 = vld [vmem:[%s51 + $0x58] sm:$0xff]
    %v252 = vld [vmem:[%s51 + $0x60] sm:$0xff]
    %v253 = vld [vmem:[%s51 + $0x68] sm:$0xff]
    %v254 = vld [vmem:[%s51 + $0x70] sm:$0xff]
    %v255 = vld [vmem:[%s51 + $0x78] sm:$0xff]
    %v256 = vld [vmem:[%s51 + $0x80] sm:$0xff]
    %v257 = vld [vmem:[%s51 + $0x88] sm:$0xff]
    %v258 = vld [vmem:[%s51 + $0x90] sm:$0xff]
    %v259 = vld [vmem:[%s51 + $0x98] sm:$0xff]
    %v260 = vld [vmem:[%s51 + $0xa0] sm:$0xff]
    %v261 = vld [vmem:[%s51 + $0xa8] sm:$0xff]
    %v262 = vld [vmem:[%s51 + $0xb0] sm:$0xff]
    %v263 = vld [vmem:[%s51 + $0xb8] sm:$0xff]
    %v264 = vld [vmem:[%s51 + $0xc0] sm:$0xff]
    %v265 = vld [vmem:[%s51 + $0xc8] sm:$0xff]
    %v266 = vld [vmem:[%s51 + $0xd0] sm:$0xff]
    %v267 = vld [vmem:[%s51 + $0xd8] sm:$0xff]
    %v268 = vld [vmem:[%s51 + $0xe0] sm:$0xff]
    %v269 = vld [vmem:[%s51 + $0xe8] sm:$0xff]
    %v270 = vld [vmem:[%s51 + $0xf0] sm:$0xff]
    %v271 = vld [vmem:[%s51 + $0xf8] sm:$0xff]
    %v272 = vld [vmem:[%s51 + $0x100] sm:$0xff]
    %v273 = vld [vmem:[%s51 + $0x108] sm:$0xff]
    %v274 = vld [vmem:[%s51 + $0x110] sm:$0xff]
    %v275 = vld [vmem:[%s51 + $0x118] sm:$0xff]
    %v276 = vld [vmem:[%s51 + $0x120] sm:$0xff]
    %v277 = vld [vmem:[%s51 + $0x128] sm:$0xff]
    %v278 = vld [vmem:[%s51 + $0x130] sm:$0xff]
    %v279 = vld [vmem:[%s51 + $0x138] sm:$0xff]
    %v280 = vld [vmem:[%s51 + $0x140] sm:$0xff]
    %v281 = vld [vmem:[%s51 + $0x148] sm:$0xff]
    %v282 = vld [vmem:[%s51 + $0x150] sm:$0xff]
    %v283 = vld [vmem:[%s51 + $0x158] sm:$0xff]
    %v284 = vld [vmem:[%s51 + $0x160] sm:$0xff]
    %v285 = vld [vmem:[%s51 + $0x168] sm:$0xff]
    %v286 = vld [vmem:[%s51 + $0x170] sm:$0xff]
    %v287 = vld [vmem:[%s51 + $0x178] sm:$0xff]
    %v288 = vld [vmem:[%s51 + $0x180] sm:$0xff]
    %v289 = vld [vmem:[%s51 + $0x188] sm:$0xff]
    %v290 = vld [vmem:[%s51 + $0x190] sm:$0xff]
    %v291 = vld [vmem:[%s51 + $0x198] sm:$0xff]
    %v292 = vld [vmem:[%s51 + $0x1a0] sm:$0xff]
    %v293 = vld [vmem:[%s51 + $0x1a8] sm:$0xff]
    %v294 = vld [vmem:[%s51 + $0x1b0] sm:$0xff]
    %v295 = vld [vmem:[%s51 + $0x1b8] sm:$0xff]
    %v296 = vld [vmem:[%s51 + $0x1c0] sm:$0xff]
    %v297 = vld [vmem:[%s51 + $0x1c8] sm:$0xff]
    %v298 = vld [vmem:[%s51 + $0x1d0] sm:$0xff]
    %v299 = vld [vmem:[%s51 + $0x1d8] sm:$0xff]
    %v300 = vld [vmem:[%s51 + $0x1e0] sm:$0xff]
    %v301 = vld [vmem:[%s51 + $0x1e8] sm:$0xff]
    %v302 = vld [vmem:[%s51 + $0x1f0] sm:$0xff]
    %v303 = vld [vmem:[%s51 + $0x1f8] sm:$0xff]
    %v304 = vld [vmem:[%s51 + $0x200] sm:$0xff]
    %v305 = vld [vmem:[%s51 + $0x208] sm:$0xff]
    %v306 = vld [vmem:[%s51 + $0x210] sm:$0xff]
    %v307 = vld [vmem:[%s51 + $0x218] sm:$0xff]
    %v308 = vld [vmem:[%s51 + $0x220] sm:$0xff]
    %v309 = vld [vmem:[%s51 + $0x228] sm:$0xff]
    %v310 = vld [vmem:[%s51 + $0x230] sm:$0xff]
    %v311 = vld [vmem:[%s51 + $0x238] sm:$0xff]
    %v312 = vld [vmem:[%s51 + $0x240] sm:$0xff]
    %v313 = vld [vmem:[%s51 + $0x248] sm:$0xff]
    %v314 = vld [vmem:[%s51 + $0x250] sm:$0xff]
    %v315 = vld [vmem:[%s51 + $0x258] sm:$0xff]
    %v316 = vld [vmem:[%s51 + $0x260] sm:$0xff]
    %v317 = vld [vmem:[%s51 + $0x268] sm:$0xff]
    %v318 = vld [vmem:[%s51 + $0x270] sm:$0xff]
    %v319 = vld [vmem:[%s51 + $0x278] sm:$0xff]
    %v320 = vld [vmem:[%s51 + $0x280] sm:$0xff]
    %v321 = vld [vmem:[%s51 + $0x288] sm:$0xff]
    %v322 = vld [vmem:[%s51 + $0x290] sm:$0xff]
    %v323 = vld [vmem:[%s51 + $0x298] sm:$0xff]
    %v324 = vld [vmem:[%s51 + $0x2a0] sm:$0xff]
    %v325 = vld [vmem:[%s51 + $0x2a8] sm:$0xff]
    %v326 = vld [vmem:[%s51 + $0x2b0] sm:$0xff]
    %v327 = vld [vmem:[%s51 + $0x2b8] sm:$0xff]
    %v328 = vld [vmem:[%s51 + $0x2c0] sm:$0xff]
    %v329 = vld [vmem:[%s51 + $0x2c8] sm:$0xff]
    %v330 = vld [vmem:[%s51 + $0x2d0] sm:$0xff]
    %v331 = vld [vmem:[%s51 + $0x2d8] sm:$0xff]
    %v332 = vld [vmem:[%s51 + $0x2e0] sm:$0xff]
    %v333 = vld [vmem:[%s51 + $0x2e8] sm:$0xff]
    %v334 = vld [vmem:[%s51 + $0x2f0] sm:$0xff]
    %v335 = vld [vmem:[%s51 + $0x2f8] sm:$0xff]
    %v336 = vld [vmem:[%s51 + $0x300] sm:$0xff]
    %v337 = vld [vmem:[%s51 + $0x308] sm:$0xff]
    %v338 = vld [vmem:[%s51 + $0x310] sm:$0xff]
    %v339 = vld [vmem:[%s51 + $0x318] sm:$0xff]
    %v340 = vld [vmem:[%s51 + $0x320] sm:$0xff]
    %v341 = vld [vmem:[%s51 + $0x328] sm:$0xff]
    %v342 = vld [vmem:[%s51 + $0x330] sm:$0xff]
    %v343 = vld [vmem:[%s51 + $0x338] sm:$0xff]
    %v344 = vld [vmem:[%s51 + $0x340] sm:$0xff]
    %v345 = vld [vmem:[%s51 + $0x348] sm:$0xff]
    %v346 = vld [vmem:[%s51 + $0x350] sm:$0xff]
    %v347 = vld [vmem:[%s51 + $0x358] sm:$0xff]
    %v348 = vld [vmem:[%s51 + $0x360] sm:$0xff]
    %v349 = vld [vmem:[%s51 + $0x368] sm:$0xff]
    %v350 = vld [vmem:[%s51 + $0x370] sm:$0xff]
    %v351 = vld [vmem:[%s51 + $0x378] sm:$0xff]
    %v352 = vld [vmem:[%s51 + $0x380] sm:$0xff]
    %v353 = vld [vmem:[%s51 + $0x388] sm:$0xff]
    %v354 = vld [vmem:[%s51 + $0x390] sm:$0xff]
    %v355 = vld [vmem:[%s51 + $0x398] sm:$0xff]
    %v356 = vld [vmem:[%s51 + $0x3a0] sm:$0xff]
    %v357 = vld [vmem:[%s51 + $0x3a8] sm:$0xff]
    %v358 = vld [vmem:[%s51 + $0x3b0] sm:$0xff]
    %v359 = vld [vmem:[%s51 + $0x3b8] sm:$0xff]
    %v360 = vld [vmem:[%s51 + $0x3c0] sm:$0xff]
    %v361 = vld [vmem:[%s51 + $0x3c8] sm:$0xff]
    %v362 = vld [vmem:[%s51 + $0x3d0] sm:$0xff]
    %v363 = vld [vmem:[%s51 + $0x3d8] sm:$0xff]
    %v364 = vld [vmem:[%s51 + $0x3e0] sm:$0xff]
    %v365 = vld [vmem:[%s51 + $0x3e8] sm:$0xff]
    %v366 = vld [vmem:[%s51 + $0x3f0] sm:$0xff]
    %v367 = vld [vmem:[%s51 + $0x3f8] sm:$0xff]
    %v368 = vld [vmem:[%s51 + $0x400] sm:$0xff]
    %v369 = vld [vmem:[%s51 + $0x408] sm:$0xff]
    %v370 = vld [vmem:[%s51 + $0x410] sm:$0xff]
    %v371 = vld [vmem:[%s51 + $0x418] sm:$0xff]
    %v372 = vld [vmem:[%s51 + $0x420] sm:$0xff]
    %v373 = vld [vmem:[%s51 + $0x428] sm:$0xff]
    %v374 = vld [vmem:[%s51 + $0x430] sm:$0xff]
    %v375 = vld [vmem:[%s51 + $0x438] sm:$0xff]
    %v376 = vld [vmem:[%s51 + $0x440] sm:$0xff]
    %v377 = vld [vmem:[%s51 + $0x448] sm:$0xff]
    %v378 = vld [vmem:[%s51 + $0x450] sm:$0xff]
    %v379 = vld [vmem:[%s51 + $0x458] sm:$0xff]
    %v380 = vld [vmem:[%s51 + $0x460] sm:$0xff]
    %v381 = vld [vmem:[%s51 + $0x468] sm:$0xff]
    %v382 = vld [vmem:[%s51 + $0x470] sm:$0xff]
    %v383 = vld [vmem:[%s51 + $0x478] sm:$0xff]
    %v384 = vld [vmem:[%s51 + $0x480] sm:$0xff]
    %v385 = vld [vmem:[%s51 + $0x488] sm:$0xff]
    %v386 = vld [vmem:[%s51 + $0x490] sm:$0xff]
    %v387 = vld [vmem:[%s51 + $0x498] sm:$0xff]
    %v388 = vld [vmem:[%s51 + $0x4a0] sm:$0xff]
    %v389 = vld [vmem:[%s51 + $0x4a8] sm:$0xff]
    %v390 = vld [vmem:[%s51 + $0x4b0] sm:$0xff]
    %v391 = vld [vmem:[%s51 + $0x4b8] sm:$0xff]
    %v392 = vld [vmem:[%s51 + $0x4c0] sm:$0xff]
    %v393 = vld [vmem:[%s51 + $0x4c8] sm:$0xff]
    %v394 = vld [vmem:[%s51 + $0x4d0] sm:$0xff]
    %v395 = vld [vmem:[%s51 + $0x4d8] sm:$0xff]
    %v396 = vld [vmem:[%s51 + $0x4e0] sm:$0xff]
    %v397 = vld [vmem:[%s51 + $0x4e8] sm:$0xff]
    %v398 = vld [vmem:[%s51 + $0x4f0] sm:$0xff]
    %v399 = vld [vmem:[%s51 + $0x4f8] sm:$0xff]
    %v400 = vld [vmem:[%s51 + $0x500] sm:$0xff]
    %v401 = vld [vmem:[%s51 + $0x508] sm:$0xff]
    %v402 = vld [vmem:[%s51 + $0x510] sm:$0xff]
    %v403 = vld [vmem:[%s51 + $0x518] sm:$0xff]
    %v404 = vld [vmem:[%s51 + $0x520] sm:$0xff]
    %v405 = vld [vmem:[%s51 + $0x528] sm:$0xff]
    %v406 = vld [vmem:[%s51 + $0x530] sm:$0xff]
    %v407 = vld [vmem:[%s51 + $0x538] sm:$0xff]
    %v408 = vld [vmem:[%s51 + $0x540] sm:$0xff]
    %v409 = vld [vmem:[%s51 + $0x548] sm:$0xff]
    %v410 = vld [vmem:[%s51 + $0x550] sm:$0xff]
    %v411 = vld [vmem:[%s51 + $0x558] sm:$0xff]
    %v412 = vld [vmem:[%s51 + $0x560] sm:$0xff]
    %v413 = vld [vmem:[%s51 + $0x568] sm:$0xff]
    %v414 = vld [vmem:[%s51 + $0x570] sm:$0xff]
    %v415 = vld [vmem:[%s51 + $0x578] sm:$0xff]
    %v416 = vld [vmem:[%s51 + $0x580] sm:$0xff]
    %v417 = vld [vmem:[%s51 + $0x588] sm:$0xff]
    %v418 = vld [vmem:[%s51 + $0x590] sm:$0xff]
    %v419 = vld [vmem:[%s51 + $0x598] sm:$0xff]
    %v420 = vld [vmem:[%s51 + $0x5a0] sm:$0xff]
    %v421 = vld [vmem:[%s51 + $0x5a8] sm:$0xff]
    %v422 = vld [vmem:[%s51 + $0x5b0] sm:$0xff]
    %v423 = vld [vmem:[%s51 + $0x5b8] sm:$0xff]
    %v424 = vld [vmem:[%s51 + $0x5c0] sm:$0xff]
    %v425 = vld [vmem:[%s51 + $0x5c8] sm:$0xff]
    %v426 = vld [vmem:[%s51 + $0x5d0] sm:$0xff]
    %v427 = vld [vmem:[%s51 + $0x5d8] sm:$0xff]
    %v428 = vld [vmem:[%s51 + $0x5e0] sm:$0xff]
    %v429 = vld [vmem:[%s51 + $0x5e8] sm:$0xff]
    %v430 = vld [vmem:[%s51 + $0x5f0] sm:$0xff]
    %v431 = vld [vmem:[%s51 + $0x5f8] sm:$0xff]
    %v432 = vld [vmem:[%s51 + $0x600] sm:$0xff]
    %v433 = vld [vmem:[%s51 + $0x608] sm:$0xff]
    %v434 = vld [vmem:[%s51 + $0x610] sm:$0xff]
    %v435 = vld [vmem:[%s51 + $0x618] sm:$0xff]
    %v436 = vld [vmem:[%s51 + $0x620] sm:$0xff]
    %v437 = vld [vmem:[%s51 + $0x628] sm:$0xff]
    %v438 = vld [vmem:[%s51 + $0x630] sm:$0xff]
    %v439 = vld [vmem:[%s51 + $0x638] sm:$0xff]
    %v440 = vld [vmem:[%s51 + $0x640] sm:$0xff]
    %v441 = vld [vmem:[%s51 + $0x648] sm:$0xff]
    %v442 = vld [vmem:[%s51 + $0x650] sm:$0xff]
    %v443 = vld [vmem:[%s51 + $0x658] sm:$0xff]
    %v444 = vld [vmem:[%s51 + $0x660] sm:$0xff]
    %v445 = vld [vmem:[%s51 + $0x668] sm:$0xff]
    %v446 = vld [vmem:[%s51 + $0x670] sm:$0xff]
    %v447 = vld [vmem:[%s51 + $0x678] sm:$0xff]
    %v448 = vld [vmem:[%s51 + $0x680] sm:$0xff]
    %v449 = vld [vmem:[%s51 + $0x688] sm:$0xff]
    %v450 = vld [vmem:[%s51 + $0x690] sm:$0xff]
    %v451 = vld [vmem:[%s51 + $0x698] sm:$0xff]
    %v452 = vld [vmem:[%s51 + $0x6a0] sm:$0xff]
    %v453 = vld [vmem:[%s51 + $0x6a8] sm:$0xff]
    %v454 = vld [vmem:[%s51 + $0x6b0] sm:$0xff]
    %v455 = vld [vmem:[%s51 + $0x6b8] sm:$0xff]
    %v456 = vld [vmem:[%s51 + $0x6c0] sm:$0xff]
    %v457 = vld [vmem:[%s51 + $0x6c8] sm:$0xff]
    %v458 = vld [vmem:[%s51 + $0x6d0] sm:$0xff]
    %v459 = vld [vmem:[%s51 + $0x6d8] sm:$0xff]
    %v460 = vld [vmem:[%s51 + $0x6e0] sm:$0xff]
    %v461 = vld [vmem:[%s51 + $0x6e8] sm:$0xff]
    %v462 = vld [vmem:[%s51 + $0x6f0] sm:$0xff]
    %v463 = vld [vmem:[%s51 + $0x6f8] sm:$0xff]
    %v464 = vld [vmem:[%s51 + $0x700] sm:$0xff]
    %v465 = vld [vmem:[%s51 + $0x708] sm:$0xff]
    %v466 = vld [vmem:[%s51 + $0x710] sm:$0xff]
    %v467 = vld [vmem:[%s51 + $0x718] sm:$0xff]
    %v468 = vld [vmem:[%s51 + $0x720] sm:$0xff]
    %v469 = vld [vmem:[%s51 + $0x728] sm:$0xff]
    %v470 = vld [vmem:[%s51 + $0x730] sm:$0xff]
    %v471 = vld [vmem:[%s51 + $0x738] sm:$0xff]
    %v472 = vld [vmem:[%s51 + $0x740] sm:$0xff]
    %v473 = vld [vmem:[%s51 + $0x748] sm:$0xff]
    %v474 = vld [vmem:[%s51 + $0x750] sm:$0xff]
    %v475 = vld [vmem:[%s51 + $0x758] sm:$0xff]
    %v476 = vld [vmem:[%s51 + $0x760] sm:$0xff]
    %v477 = vld [vmem:[%s51 + $0x768] sm:$0xff]
    %v478 = vld [vmem:[%s51 + $0x770] sm:$0xff]
    %v479 = vld [vmem:[%s51 + $0x778] sm:$0xff]
    %v480 = vld [vmem:[%s51 + $0x780] sm:$0xff]
    %v481 = vld [vmem:[%s51 + $0x788] sm:$0xff]
    %v482 = vld [vmem:[%s51 + $0x790] sm:$0xff]
    %v483 = vld [vmem:[%s51 + $0x798] sm:$0xff]
    %v484 = vld [vmem:[%s51 + $0x7a0] sm:$0xff]
    %v485 = vld [vmem:[%s51 + $0x7a8] sm:$0xff]
    %v486 = vld [vmem:[%s51 + $0x7b0] sm:$0xff]
    %v487 = vld [vmem:[%s51 + $0x7b8] sm:$0xff]
    %v488 = vld [vmem:[%s51 + $0x7c0] sm:$0xff]
    %v489 = vld [vmem:[%s51 + $0x7c8] sm:$0xff]
    %v490 = vld [vmem:[%s51 + $0x7d0] sm:$0xff]
    %v491 = vld [vmem:[%s51 + $0x7d8] sm:$0xff]
    %v492 = vld [vmem:[%s51 + $0x7e0] sm:$0xff]
    %v493 = vld [vmem:[%s51 + $0x7e8] sm:$0xff]
    %v494 = vld [vmem:[%s51 + $0x7f0] sm:$0xff]
    %v495 = vld [vmem:[%s51 + $0x7f8] sm:$0xff]
    %v496 = vld [vmem:[#allocation2] sm:$0x1]
    %v497 = vmul.f32 %v240, %v240
    %v498 = vmul.f32 %v241, %v241
    %v499 = vmul.f32 %v242, %v242
    %v500 = vmul.f32 %v243, %v243
    %v501 = vmul.f32 %v244, %v244
    %v502 = vmul.f32 %v245, %v245
    %v503 = vmul.f32 %v246, %v246
    %v504 = vmul.f32 %v247, %v247
    %v505 = vmul.f32 %v248, %v248
    %v506 = vmul.f32 %v249, %v249
    %v507 = vmul.f32 %v250, %v250
    %v508 = vmul.f32 %v251, %v251
    %v509 = vmul.f32 %v252, %v252
    %v510 = vmul.f32 %v253, %v253
    %v511 = vmul.f32 %v254, %v254
    %v512 = vmul.f32 %v255, %v255
    %v513 = vmul.f32 %v256, %v256
    %v514 = vmul.f32 %v257, %v257
    %v515 = vmul.f32 %v258, %v258
    %v516 = vmul.f32 %v259, %v259
    %v517 = vmul.f32 %v260, %v260
    %v518 = vmul.f32 %v261, %v261
    %v519 = vmul.f32 %v262, %v262
    %v520 = vmul.f32 %v263, %v263
    %v521 = vmul.f32 %v264, %v264
    %v522 = vmul.f32 %v265, %v265
    %v523 = vmul.f32 %v266, %v266
    %v524 = vmul.f32 %v267, %v267
    %v525 = vmul.f32 %v268, %v268
    %v526 = vmul.f32 %v269, %v269
    %v527 = vmul.f32 %v270, %v270
    %v528 = vmul.f32 %v271, %v271
    %v529 = vmul.f32 %v272, %v272
    %v530 = vmul.f32 %v273, %v273
    %v531 = vmul.f32 %v274, %v274
    %v532 = vmul.f32 %v275, %v275
    %v533 = vmul.f32 %v276, %v276
    %v534 = vmul.f32 %v277, %v277
    %v535 = vmul.f32 %v278, %v278
    %v536 = vmul.f32 %v279, %v279
    %v537 = vmul.f32 %v280, %v280
    %v538 = vmul.f32 %v281, %v281
    %v539 = vmul.f32 %v282, %v282
    %v540 = vmul.f32 %v283, %v283
    %v541 = vmul.f32 %v284, %v284
    %v542 = vmul.f32 %v285, %v285
    %v543 = vmul.f32 %v286, %v286
    %v544 = vmul.f32 %v287, %v287
    %v545 = vmul.f32 %v288, %v288
    %v546 = vmul.f32 %v289, %v289
    %v547 = vmul.f32 %v290, %v290
    %v548 = vmul.f32 %v291, %v291
    %v549 = vmul.f32 %v292, %v292
    %v550 = vmul.f32 %v293, %v293
    %v551 = vmul.f32 %v294, %v294
    %v552 = vmul.f32 %v295, %v295
    %v553 = vmul.f32 %v296, %v296
    %v554 = vmul.f32 %v297, %v297
    %v555 = vmul.f32 %v298, %v298
    %v556 = vmul.f32 %v299, %v299
    %v557 = vmul.f32 %v300, %v300
    %v558 = vmul.f32 %v301, %v301
    %v559 = vmul.f32 %v302, %v302
    %v560 = vmul.f32 %v303, %v303
    %v561 = vmul.f32 %v304, %v304
    %v562 = vmul.f32 %v305, %v305
    %v563 = vmul.f32 %v306, %v306
    %v564 = vmul.f32 %v307, %v307
    %v565 = vmul.f32 %v308, %v308
    %v566 = vmul.f32 %v309, %v309
    %v567 = vmul.f32 %v310, %v310
    %v568 = vmul.f32 %v311, %v311
    %v569 = vmul.f32 %v312, %v312
    %v570 = vmul.f32 %v313, %v313
    %v571 = vmul.f32 %v314, %v314
    %v572 = vmul.f32 %v315, %v315
    %v573 = vmul.f32 %v316, %v316
    %v574 = vmul.f32 %v317, %v317
    %v575 = vmul.f32 %v318, %v318
    %v576 = vmul.f32 %v319, %v319
    %v577 = vmul.f32 %v320, %v320
    %v578 = vmul.f32 %v321, %v321
    %v579 = vmul.f32 %v322, %v322
    %v580 = vmul.f32 %v323, %v323
    %v581 = vmul.f32 %v324, %v324
    %v582 = vmul.f32 %v325, %v325
    %v583 = vmul.f32 %v326, %v326
    %v584 = vmul.f32 %v327, %v327
    %v585 = vmul.f32 %v328, %v328
    %v586 = vmul.f32 %v329, %v329
    %v587 = vmul.f32 %v330, %v330
    %v588 = vmul.f32 %v331, %v331
    %v589 = vmul.f32 %v332, %v332
    %v590 = vmul.f32 %v333, %v333
    %v591 = vmul.f32 %v334, %v334
    %v592 = vmul.f32 %v335, %v335
    %v593 = vmul.f32 %v336, %v336
    %v594 = vmul.f32 %v337, %v337
    %v595 = vmul.f32 %v338, %v338
    %v596 = vmul.f32 %v339, %v339
    %v597 = vmul.f32 %v340, %v340
    %v598 = vmul.f32 %v341, %v341
    %v599 = vmul.f32 %v342, %v342
    %v600 = vmul.f32 %v343, %v343
    %v601 = vmul.f32 %v344, %v344
    %v602 = vmul.f32 %v345, %v345
    %v603 = vmul.f32 %v346, %v346
    %v604 = vmul.f32 %v347, %v347
    %v605 = vmul.f32 %v348, %v348
    %v606 = vmul.f32 %v349, %v349
    %v607 = vmul.f32 %v350, %v350
    %v608 = vmul.f32 %v351, %v351
    %v609 = vmul.f32 %v352, %v352
    %v610 = vmul.f32 %v353, %v353
    %v611 = vmul.f32 %v354, %v354
    %v612 = vmul.f32 %v355, %v355
    %v613 = vmul.f32 %v356, %v356
    %v614 = vmul.f32 %v357, %v357
    %v615 = vmul.f32 %v358, %v358
    %v616 = vmul.f32 %v359, %v359
    %v617 = vmul.f32 %v360, %v360
    %v618 = vmul.f32 %v361, %v361
    %v619 = vmul.f32 %v362, %v362
    %v620 = vmul.f32 %v363, %v363
    %v621 = vmul.f32 %v364, %v364
    %v622 = vmul.f32 %v365, %v365
    %v623 = vmul.f32 %v366, %v366
    %v624 = vmul.f32 %v367, %v367
    %v625 = vmul.f32 %v368, %v368
    %v626 = vmul.f32 %v369, %v369
    %v627 = vmul.f32 %v370, %v370
    %v628 = vmul.f32 %v371, %v371
    %v629 = vmul.f32 %v372, %v372
    %v630 = vmul.f32 %v373, %v373
    %v631 = vmul.f32 %v374, %v374
    %v632 = vmul.f32 %v375, %v375
    %v633 = vmul.f32 %v376, %v376
    %v634 = vmul.f32 %v377, %v377
    %v635 = vmul.f32 %v378, %v378
    %v636 = vmul.f32 %v379, %v379
    %v637 = vmul.f32 %v380, %v380
    %v638 = vmul.f32 %v381, %v381
    %v639 = vmul.f32 %v382, %v382
    %v640 = vmul.f32 %v383, %v383
    %v641 = vmul.f32 %v384, %v384
    %v642 = vmul.f32 %v385, %v385
    %v643 = vmul.f32 %v386, %v386
    %v644 = vmul.f32 %v387, %v387
    %v645 = vmul.f32 %v388, %v388
    %v646 = vmul.f32 %v389, %v389
    %v647 = vmul.f32 %v390, %v390
    %v648 = vmul.f32 %v391, %v391
    %v649 = vmul.f32 %v392, %v392
    %v650 = vmul.f32 %v393, %v393
    %v651 = vmul.f32 %v394, %v394
    %v652 = vmul.f32 %v395, %v395
    %v653 = vmul.f32 %v396, %v396
    %v654 = vmul.f32 %v397, %v397
    %v655 = vmul.f32 %v398, %v398
    %v656 = vmul.f32 %v399, %v399
    %v657 = vmul.f32 %v400, %v400
    %v658 = vmul.f32 %v401, %v401
    %v659 = vmul.f32 %v402, %v402
    %v660 = vmul.f32 %v403, %v403
    %v661 = vmul.f32 %v404, %v404
    %v662 = vmul.f32 %v405, %v405
    %v663 = vmul.f32 %v406, %v406
    %v664 = vmul.f32 %v407, %v407
    %v665 = vmul.f32 %v408, %v408
    %v666 = vmul.f32 %v409, %v409
    %v667 = vmul.f32 %v410, %v410
    %v668 = vmul.f32 %v411, %v411
    %v669 = vmul.f32 %v412, %v412
    %v670 = vmul.f32 %v413, %v413
    %v671 = vmul.f32 %v414, %v414
    %v672 = vmul.f32 %v415, %v415
    %v673 = vmul.f32 %v416, %v416
    %v674 = vmul.f32 %v417, %v417
    %v675 = vmul.f32 %v418, %v418
    %v676 = vmul.f32 %v419, %v419
    %v677 = vmul.f32 %v420, %v420
    %v678 = vmul.f32 %v421, %v421
    %v679 = vmul.f32 %v422, %v422
    %v680 = vmul.f32 %v423, %v423
    %v681 = vmul.f32 %v424, %v424
    %v682 = vmul.f32 %v425, %v425
    %v683 = vmul.f32 %v426, %v426
    %v684 = vmul.f32 %v427, %v427
    %v685 = vmul.f32 %v428, %v428
    %v686 = vmul.f32 %v429, %v429
    %v687 = vmul.f32 %v430, %v430
    %v688 = vmul.f32 %v431, %v431
    %v689 = vmul.f32 %v432, %v432
    %v690 = vmul.f32 %v433, %v433
    %v691 = vmul.f32 %v434, %v434
    %v692 = vmul.f32 %v435, %v435
    %v693 = vmul.f32 %v436, %v436
    %v694 = vmul.f32 %v437, %v437
    %v695 = vmul.f32 %v438, %v438
    %v696 = vmul.f32 %v439, %v439
    %v697 = vmul.f32 %v440, %v440
    %v698 = vmul.f32 %v441, %v441
    %v699 = vmul.f32 %v442, %v442
    %v700 = vmul.f32 %v443, %v443
    %v701 = vmul.f32 %v444, %v444
    %v702 = vmul.f32 %v445, %v445
    %v703 = vmul.f32 %v446, %v446
    %v704 = vmul.f32 %v447, %v447
    %v705 = vmul.f32 %v448, %v448
    %v706 = vmul.f32 %v449, %v449
    %v707 = vmul.f32 %v450, %v450
    %v708 = vmul.f32 %v451, %v451
    %v709 = vmul.f32 %v452, %v452
    %v710 = vmul.f32 %v453, %v453
    %v711 = vmul.f32 %v454, %v454
    %v712 = vmul.f32 %v455, %v455
    %v713 = vmul.f32 %v456, %v456
    %v714 = vmul.f32 %v457, %v457
    %v715 = vmul.f32 %v458, %v458
    %v716 = vmul.f32 %v459, %v459
    %v717 = vmul.f32 %v460, %v460
    %v718 = vmul.f32 %v461, %v461
    %v719 = vmul.f32 %v462, %v462
    %v720 = vmul.f32 %v463, %v463
    %v721 = vmul.f32 %v464, %v464
    %v722 = vmul.f32 %v465, %v465
    %v723 = vmul.f32 %v466, %v466
    %v724 = vmul.f32 %v467, %v467
    %v725 = vmul.f32 %v468, %v468
    %v726 = vmul.f32 %v469, %v469
    %v727 = vmul.f32 %v470, %v470
    %v728 = vmul.f32 %v471, %v471
    %v729 = vmul.f32 %v472, %v472
    %v730 = vmul.f32 %v473, %v473
    %v731 = vmul.f32 %v474, %v474
    %v732 = vmul.f32 %v475, %v475
    %v733 = vmul.f32 %v476, %v476
    %v734 = vmul.f32 %v477, %v477
    %v735 = vmul.f32 %v478, %v478
    %v736 = vmul.f32 %v479, %v479
    %v737 = vmul.f32 %v480, %v480
    %v738 = vmul.f32 %v481, %v481
    %v739 = vmul.f32 %v482, %v482
    %v740 = vmul.f32 %v483, %v483
    %v741 = vmul.f32 %v484, %v484
    %v742 = vmul.f32 %v485, %v485
    %v743 = vmul.f32 %v486, %v486
    %v744 = vmul.f32 %v487, %v487
    %v745 = vmul.f32 %v488, %v488
    %v746 = vmul.f32 %v489, %v489
    %v747 = vmul.f32 %v490, %v490
    %v748 = vmul.f32 %v491, %v491
    %v749 = vmul.f32 %v492, %v492
    %v750 = vmul.f32 %v493, %v493
    %v751 = vmul.f32 %v494, %v494
    %v752 = vmul.f32 %v495, %v495
    %vm753 = vcmask 523264
    %v754 = vsel %vm753, %v497, 0.0
    %v755 = vsel %vm753, %v498, 0.0
    %v756 = vadd.f32 %v754, %v755
    %v757 = vsel %vm753, %v499, 0.0
    %v758 = vadd.f32 %v756, %v757
    %v759 = vsel %vm753, %v500, 0.0
    %v760 = vadd.f32 %v758, %v759
    %v761 = vsel %vm753, %v501, 0.0
    %v762 = vadd.f32 %v760, %v761
    %v763 = vsel %vm753, %v502, 0.0
    %v764 = vadd.f32 %v762, %v763
    %v765 = vsel %vm753, %v503, 0.0
    %v766 = vadd.f32 %v764, %v765
    %v767 = vsel %vm753, %v504, 0.0
    %v768 = vadd.f32 %v766, %v767
    %v769 = vsel %vm753, %v505, 0.0
    %v770 = vadd.f32 %v768, %v769
    %v771 = vsel %vm753, %v506, 0.0
    %v772 = vadd.f32 %v770, %v771
    %v773 = vsel %vm753, %v507, 0.0
    %v774 = vadd.f32 %v772, %v773
    %v775 = vsel %vm753, %v508, 0.0
    %v776 = vadd.f32 %v774, %v775
    %v777 = vsel %vm753, %v509, 0.0
    %v778 = vadd.f32 %v776, %v777
    %v779 = vsel %vm753, %v510, 0.0
    %v780 = vadd.f32 %v778, %v779
    %v781 = vsel %vm753, %v511, 0.0
    %v782 = vadd.f32 %v780, %v781
    %v783 = vsel %vm753, %v512, 0.0
    %v784 = vadd.f32 %v782, %v783
    %v785 = vsel %vm753, %v513, 0.0
    %v786 = vadd.f32 %v784, %v785
    %v787 = vsel %vm753, %v514, 0.0
    %v788 = vadd.f32 %v786, %v787
    %v789 = vsel %vm753, %v515, 0.0
    %v790 = vadd.f32 %v788, %v789
    %v791 = vsel %vm753, %v516, 0.0
    %v792 = vadd.f32 %v790, %v791
    %v793 = vsel %vm753, %v517, 0.0
    %v794 = vadd.f32 %v792, %v793
    %v795 = vsel %vm753, %v518, 0.0
    %v796 = vadd.f32 %v794, %v795
    %v797 = vsel %vm753, %v519, 0.0
    %v798 = vadd.f32 %v796, %v797
    %v799 = vsel %vm753, %v520, 0.0
    %v800 = vadd.f32 %v798, %v799
    %v801 = vsel %vm753, %v521, 0.0
    %v802 = vadd.f32 %v800, %v801
    %v803 = vsel %vm753, %v522, 0.0
    %v804 = vadd.f32 %v802, %v803
    %v805 = vsel %vm753, %v523, 0.0
    %v806 = vadd.f32 %v804, %v805
    %v807 = vsel %vm753, %v524, 0.0
    %v808 = vadd.f32 %v806, %v807
    %v809 = vsel %vm753, %v525, 0.0
    %v810 = vadd.f32 %v808, %v809
    %v811 = vsel %vm753, %v526, 0.0
    %v812 = vadd.f32 %v810, %v811
    %v813 = vsel %vm753, %v527, 0.0
    %v814 = vadd.f32 %v812, %v813
    %v815 = vsel %vm753, %v528, 0.0
    %v816 = vadd.f32 %v814, %v815
    %v817 = vsel %vm753, %v529, 0.0
    %v818 = vadd.f32 %v816, %v817
    %v819 = vsel %vm753, %v530, 0.0
    %v820 = vadd.f32 %v818, %v819
    %v821 = vsel %vm753, %v531, 0.0
    %v822 = vadd.f32 %v820, %v821
    %v823 = vsel %vm753, %v532, 0.0
    %v824 = vadd.f32 %v822, %v823
    %v825 = vsel %vm753, %v533, 0.0
    %v826 = vadd.f32 %v824, %v825
    %v827 = vsel %vm753, %v534, 0.0
    %v828 = vadd.f32 %v826, %v827
    %v829 = vsel %vm753, %v535, 0.0
    %v830 = vadd.f32 %v828, %v829
    %v831 = vsel %vm753, %v536, 0.0
    %v832 = vadd.f32 %v830, %v831
    %v833 = vsel %vm753, %v537, 0.0
    %v834 = vadd.f32 %v832, %v833
    %v835 = vsel %vm753, %v538, 0.0
    %v836 = vadd.f32 %v834, %v835
    %v837 = vsel %vm753, %v539, 0.0
    %v838 = vadd.f32 %v836, %v837
    %v839 = vsel %vm753, %v540, 0.0
    %v840 = vadd.f32 %v838, %v839
    %v841 = vsel %vm753, %v541, 0.0
    %v842 = vadd.f32 %v840, %v841
    %v843 = vsel %vm753, %v542, 0.0
    %v844 = vadd.f32 %v842, %v843
    %v845 = vsel %vm753, %v543, 0.0
    %v846 = vadd.f32 %v844, %v845
    %v847 = vsel %vm753, %v544, 0.0
    %v848 = vadd.f32 %v846, %v847
    %v849 = vsel %vm753, %v545, 0.0
    %v850 = vadd.f32 %v848, %v849
    %v851 = vsel %vm753, %v546, 0.0
    %v852 = vadd.f32 %v850, %v851
    %v853 = vsel %vm753, %v547, 0.0
    %v854 = vadd.f32 %v852, %v853
    %v855 = vsel %vm753, %v548, 0.0
    %v856 = vadd.f32 %v854, %v855
    %v857 = vsel %vm753, %v549, 0.0
    %v858 = vadd.f32 %v856, %v857
    %v859 = vsel %vm753, %v550, 0.0
    %v860 = vadd.f32 %v858, %v859
    %v861 = vsel %vm753, %v551, 0.0
    %v862 = vadd.f32 %v860, %v861
    %v863 = vsel %vm753, %v552, 0.0
    %v864 = vadd.f32 %v862, %v863
    %v865 = vsel %vm753, %v553, 0.0
    %v866 = vadd.f32 %v864, %v865
    %v867 = vsel %vm753, %v554, 0.0
    %v868 = vadd.f32 %v866, %v867
    %v869 = vsel %vm753, %v555, 0.0
    %v870 = vadd.f32 %v868, %v869
    %v871 = vsel %vm753, %v556, 0.0
    %v872 = vadd.f32 %v870, %v871
    %v873 = vsel %vm753, %v557, 0.0
    %v874 = vadd.f32 %v872, %v873
    %v875 = vsel %vm753, %v558, 0.0
    %v876 = vadd.f32 %v874, %v875
    %v877 = vsel %vm753, %v559, 0.0
    %v878 = vadd.f32 %v876, %v877
    %v879 = vsel %vm753, %v560, 0.0
    %v880 = vadd.f32 %v878, %v879
    %v881 = vsel %vm753, %v561, 0.0
    %v882 = vadd.f32 %v880, %v881
    %v883 = vsel %vm753, %v562, 0.0
    %v884 = vadd.f32 %v882, %v883
    %v885 = vsel %vm753, %v563, 0.0
    %v886 = vadd.f32 %v884, %v885
    %v887 = vsel %vm753, %v564, 0.0
    %v888 = vadd.f32 %v886, %v887
    %v889 = vsel %vm753, %v565, 0.0
    %v890 = vadd.f32 %v888, %v889
    %v891 = vsel %vm753, %v566, 0.0
    %v892 = vadd.f32 %v890, %v891
    %v893 = vsel %vm753, %v567, 0.0
    %v894 = vadd.f32 %v892, %v893
    %v895 = vsel %vm753, %v568, 0.0
    %v896 = vadd.f32 %v894, %v895
    %v897 = vsel %vm753, %v569, 0.0
    %v898 = vadd.f32 %v896, %v897
    %v899 = vsel %vm753, %v570, 0.0
    %v900 = vadd.f32 %v898, %v899
    %v901 = vsel %vm753, %v571, 0.0
    %v902 = vadd.f32 %v900, %v901
    %v903 = vsel %vm753, %v572, 0.0
    %v904 = vadd.f32 %v902, %v903
    %v905 = vsel %vm753, %v573, 0.0
    %v906 = vadd.f32 %v904, %v905
    %v907 = vsel %vm753, %v574, 0.0
    %v908 = vadd.f32 %v906, %v907
    %v909 = vsel %vm753, %v575, 0.0
    %v910 = vadd.f32 %v908, %v909
    %v911 = vsel %vm753, %v576, 0.0
    %v912 = vadd.f32 %v910, %v911
    %v913 = vsel %vm753, %v577, 0.0
    %v914 = vadd.f32 %v912, %v913
    %v915 = vsel %vm753, %v578, 0.0
    %v916 = vadd.f32 %v914, %v915
    %v917 = vsel %vm753, %v579, 0.0
    %v918 = vadd.f32 %v916, %v917
    %v919 = vsel %vm753, %v580, 0.0
    %v920 = vadd.f32 %v918, %v919
    %v921 = vsel %vm753, %v581, 0.0
    %v922 = vadd.f32 %v920, %v921
    %v923 = vsel %vm753, %v582, 0.0
    %v924 = vadd.f32 %v922, %v923
    %v925 = vsel %vm753, %v583, 0.0
    %v926 = vadd.f32 %v924, %v925
    %v927 = vsel %vm753, %v584, 0.0
    %v928 = vadd.f32 %v926, %v927
    %v929 = vsel %vm753, %v585, 0.0
    %v930 = vadd.f32 %v928, %v929
    %v931 = vsel %vm753, %v586, 0.0
    %v932 = vadd.f32 %v930, %v931
    %v933 = vsel %vm753, %v587, 0.0
    %v934 = vadd.f32 %v932, %v933
    %v935 = vsel %vm753, %v588, 0.0
    %v936 = vadd.f32 %v934, %v935
    %v937 = vsel %vm753, %v589, 0.0
    %v938 = vadd.f32 %v936, %v937
    %v939 = vsel %vm753, %v590, 0.0
    %v940 = vadd.f32 %v938, %v939
    %v941 = vsel %vm753, %v591, 0.0
    %v942 = vadd.f32 %v940, %v941
    %v943 = vsel %vm753, %v592, 0.0
    %v944 = vadd.f32 %v942, %v943
    %v945 = vsel %vm753, %v593, 0.0
    %v946 = vadd.f32 %v944, %v945
    %v947 = vsel %vm753, %v594, 0.0
    %v948 = vadd.f32 %v946, %v947
    %v949 = vsel %vm753, %v595, 0.0
    %v950 = vadd.f32 %v948, %v949
    %v951 = vsel %vm753, %v596, 0.0
    %v952 = vadd.f32 %v950, %v951
    %v953 = vsel %vm753, %v597, 0.0
    %v954 = vadd.f32 %v952, %v953
    %v955 = vsel %vm753, %v598, 0.0
    %v956 = vadd.f32 %v954, %v955
    %v957 = vsel %vm753, %v599, 0.0
    %v958 = vadd.f32 %v956, %v957
    %v959 = vsel %vm753, %v600, 0.0
    %v960 = vadd.f32 %v958, %v959
    %v961 = vsel %vm753, %v601, 0.0
    %v962 = vadd.f32 %v960, %v961
    %v963 = vsel %vm753, %v602, 0.0
    %v964 = vadd.f32 %v962, %v963
    %v965 = vsel %vm753, %v603, 0.0
    %v966 = vadd.f32 %v964, %v965
    %v967 = vsel %vm753, %v604, 0.0
    %v968 = vadd.f32 %v966, %v967
    %v969 = vsel %vm753, %v605, 0.0
    %v970 = vadd.f32 %v968, %v969
    %v971 = vsel %vm753, %v606, 0.0
    %v972 = vadd.f32 %v970, %v971
    %v973 = vsel %vm753, %v607, 0.0
    %v974 = vadd.f32 %v972, %v973
    %v975 = vsel %vm753, %v608, 0.0
    %v976 = vadd.f32 %v974, %v975
    %v977 = vsel %vm753, %v609, 0.0
    %v978 = vadd.f32 %v976, %v977
    %v979 = vsel %vm753, %v610, 0.0
    %v980 = vadd.f32 %v978, %v979
    %v981 = vsel %vm753, %v611, 0.0
    %v982 = vadd.f32 %v980, %v981
    %v983 = vsel %vm753, %v612, 0.0
    %v984 = vadd.f32 %v982, %v983
    %v985 = vsel %vm753, %v613, 0.0
    %v986 = vadd.f32 %v984, %v985
    %v987 = vsel %vm753, %v614, 0.0
    %v988 = vadd.f32 %v986, %v987
    %v989 = vsel %vm753, %v615, 0.0
    %v990 = vadd.f32 %v988, %v989
    %v991 = vsel %vm753, %v616, 0.0
    %v992 = vadd.f32 %v990, %v991
    %v993 = vsel %vm753, %v617, 0.0
    %v994 = vadd.f32 %v992, %v993
    %v995 = vsel %vm753, %v618, 0.0
    %v996 = vadd.f32 %v994, %v995
    %v997 = vsel %vm753, %v619, 0.0
    %v998 = vadd.f32 %v996, %v997
    %v999 = vsel %vm753, %v620, 0.0
    %v1000 = vadd.f32 %v998, %v999
    %v1001 = vsel %vm753, %v621, 0.0
    %v1002 = vadd.f32 %v1000, %v1001
    %v1003 = vsel %vm753, %v622, 0.0
    %v1004 = vadd.f32 %v1002, %v1003
    %v1005 = vsel %vm753, %v623, 0.0
    %v1006 = vadd.f32 %v1004, %v1005
    %v1007 = vsel %vm753, %v624, 0.0
    %v1008 = vadd.f32 %v1006, %v1007
    %v1009 = vsel %vm753, %v625, 0.0
    %v1010 = vadd.f32 %v1008, %v1009
    %v1011 = vsel %vm753, %v626, 0.0
    %v1012 = vadd.f32 %v1010, %v1011
    %v1013 = vsel %vm753, %v627, 0.0
    %v1014 = vadd.f32 %v1012, %v1013
    %v1015 = vsel %vm753, %v628, 0.0
    %v1016 = vadd.f32 %v1014, %v1015
    %v1017 = vsel %vm753, %v629, 0.0
    %v1018 = vadd.f32 %v1016, %v1017
    %v1019 = vsel %vm753, %v630, 0.0
    %v1020 = vadd.f32 %v1018, %v1019
    %v1021 = vsel %vm753, %v631, 0.0
    %v1022 = vadd.f32 %v1020, %v1021
    %v1023 = vsel %vm753, %v632, 0.0
    %v1024 = vadd.f32 %v1022, %v1023
    %v1025 = vsel %vm753, %v633, 0.0
    %v1026 = vadd.f32 %v1024, %v1025
    %v1027 = vsel %vm753, %v634, 0.0
    %v1028 = vadd.f32 %v1026, %v1027
    %v1029 = vsel %vm753, %v635, 0.0
    %v1030 = vadd.f32 %v1028, %v1029
    %v1031 = vsel %vm753, %v636, 0.0
    %v1032 = vadd.f32 %v1030, %v1031
    %v1033 = vsel %vm753, %v637, 0.0
    %v1034 = vadd.f32 %v1032, %v1033
    %v1035 = vsel %vm753, %v638, 0.0
    %v1036 = vadd.f32 %v1034, %v1035
    %v1037 = vsel %vm753, %v639, 0.0
    %v1038 = vadd.f32 %v1036, %v1037
    %v1039 = vsel %vm753, %v640, 0.0
    %v1040 = vadd.f32 %v1038, %v1039
    %v1041 = vsel %vm753, %v641, 0.0
    %v1042 = vadd.f32 %v1040, %v1041
    %v1043 = vsel %vm753, %v642, 0.0
    %v1044 = vadd.f32 %v1042, %v1043
    %v1045 = vsel %vm753, %v643, 0.0
    %v1046 = vadd.f32 %v1044, %v1045
    %v1047 = vsel %vm753, %v644, 0.0
    %v1048 = vadd.f32 %v1046, %v1047
    %v1049 = vsel %vm753, %v645, 0.0
    %v1050 = vadd.f32 %v1048, %v1049
    %v1051 = vsel %vm753, %v646, 0.0
    %v1052 = vadd.f32 %v1050, %v1051
    %v1053 = vsel %vm753, %v647, 0.0
    %v1054 = vadd.f32 %v1052, %v1053
    %v1055 = vsel %vm753, %v648, 0.0
    %v1056 = vadd.f32 %v1054, %v1055
    %v1057 = vsel %vm753, %v649, 0.0
    %v1058 = vadd.f32 %v1056, %v1057
    %v1059 = vsel %vm753, %v650, 0.0
    %v1060 = vadd.f32 %v1058, %v1059
    %v1061 = vsel %vm753, %v651, 0.0
    %v1062 = vadd.f32 %v1060, %v1061
    %v1063 = vsel %vm753, %v652, 0.0
    %v1064 = vadd.f32 %v1062, %v1063
    %v1065 = vsel %vm753, %v653, 0.0
    %v1066 = vadd.f32 %v1064, %v1065
    %v1067 = vsel %vm753, %v654, 0.0
    %v1068 = vadd.f32 %v1066, %v1067
    %v1069 = vsel %vm753, %v655, 0.0
    %v1070 = vadd.f32 %v1068, %v1069
    %v1071 = vsel %vm753, %v656, 0.0
    %v1072 = vadd.f32 %v1070, %v1071
    %v1073 = vsel %vm753, %v657, 0.0
    %v1074 = vadd.f32 %v1072, %v1073
    %v1075 = vsel %vm753, %v658, 0.0
    %v1076 = vadd.f32 %v1074, %v1075
    %v1077 = vsel %vm753, %v659, 0.0
    %v1078 = vadd.f32 %v1076, %v1077
    %v1079 = vsel %vm753, %v660, 0.0
    %v1080 = vadd.f32 %v1078, %v1079
    %v1081 = vsel %vm753, %v661, 0.0
    %v1082 = vadd.f32 %v1080, %v1081
    %v1083 = vsel %vm753, %v662, 0.0
    %v1084 = vadd.f32 %v1082, %v1083
    %v1085 = vsel %vm753, %v663, 0.0
    %v1086 = vadd.f32 %v1084, %v1085
    %v1087 = vsel %vm753, %v664, 0.0
    %v1088 = vadd.f32 %v1086, %v1087
    %v1089 = vsel %vm753, %v665, 0.0
    %v1090 = vadd.f32 %v1088, %v1089
    %v1091 = vsel %vm753, %v666, 0.0
    %v1092 = vadd.f32 %v1090, %v1091
    %v1093 = vsel %vm753, %v667, 0.0
    %v1094 = vadd.f32 %v1092, %v1093
    %v1095 = vsel %vm753, %v668, 0.0
    %v1096 = vadd.f32 %v1094, %v1095
    %v1097 = vsel %vm753, %v669, 0.0
    %v1098 = vadd.f32 %v1096, %v1097
    %v1099 = vsel %vm753, %v670, 0.0
    %v1100 = vadd.f32 %v1098, %v1099
    %v1101 = vsel %vm753, %v671, 0.0
    %v1102 = vadd.f32 %v1100, %v1101
    %v1103 = vsel %vm753, %v672, 0.0
    %v1104 = vadd.f32 %v1102, %v1103
    %v1105 = vsel %vm753, %v673, 0.0
    %v1106 = vadd.f32 %v1104, %v1105
    %v1107 = vsel %vm753, %v674, 0.0
    %v1108 = vadd.f32 %v1106, %v1107
    %v1109 = vsel %vm753, %v675, 0.0
    %v1110 = vadd.f32 %v1108, %v1109
    %v1111 = vsel %vm753, %v676, 0.0
    %v1112 = vadd.f32 %v1110, %v1111
    %v1113 = vsel %vm753, %v677, 0.0
    %v1114 = vadd.f32 %v1112, %v1113
    %v1115 = vsel %vm753, %v678, 0.0
    %v1116 = vadd.f32 %v1114, %v1115
    %v1117 = vsel %vm753, %v679, 0.0
    %v1118 = vadd.f32 %v1116, %v1117
    %v1119 = vsel %vm753, %v680, 0.0
    %v1120 = vadd.f32 %v1118, %v1119
    %v1121 = vsel %vm753, %v681, 0.0
    %v1122 = vadd.f32 %v1120, %v1121
    %v1123 = vsel %vm753, %v682, 0.0
    %v1124 = vadd.f32 %v1122, %v1123
    %v1125 = vsel %vm753, %v683, 0.0
    %v1126 = vadd.f32 %v1124, %v1125
    %v1127 = vsel %vm753, %v684, 0.0
    %v1128 = vadd.f32 %v1126, %v1127
    %v1129 = vsel %vm753, %v685, 0.0
    %v1130 = vadd.f32 %v1128, %v1129
    %v1131 = vsel %vm753, %v686, 0.0
    %v1132 = vadd.f32 %v1130, %v1131
    %v1133 = vsel %vm753, %v687, 0.0
    %v1134 = vadd.f32 %v1132, %v1133
    %v1135 = vsel %vm753, %v688, 0.0
    %v1136 = vadd.f32 %v1134, %v1135
    %v1137 = vsel %vm753, %v689, 0.0
    %v1138 = vadd.f32 %v1136, %v1137
    %v1139 = vsel %vm753, %v690, 0.0
    %v1140 = vadd.f32 %v1138, %v1139
    %v1141 = vsel %vm753, %v691, 0.0
    %v1142 = vadd.f32 %v1140, %v1141
    %v1143 = vsel %vm753, %v692, 0.0
    %v1144 = vadd.f32 %v1142, %v1143
    %v1145 = vsel %vm753, %v693, 0.0
    %v1146 = vadd.f32 %v1144, %v1145
    %v1147 = vsel %vm753, %v694, 0.0
    %v1148 = vadd.f32 %v1146, %v1147
    %v1149 = vsel %vm753, %v695, 0.0
    %v1150 = vadd.f32 %v1148, %v1149
    %v1151 = vsel %vm753, %v696, 0.0
    %v1152 = vadd.f32 %v1150, %v1151
    %v1153 = vsel %vm753, %v697, 0.0
    %v1154 = vadd.f32 %v1152, %v1153
    %v1155 = vsel %vm753, %v698, 0.0
    %v1156 = vadd.f32 %v1154, %v1155
    %v1157 = vsel %vm753, %v699, 0.0
    %v1158 = vadd.f32 %v1156, %v1157
    %v1159 = vsel %vm753, %v700, 0.0
    %v1160 = vadd.f32 %v1158, %v1159
    %v1161 = vsel %vm753, %v701, 0.0
    %v1162 = vadd.f32 %v1160, %v1161
    %v1163 = vsel %vm753, %v702, 0.0
    %v1164 = vadd.f32 %v1162, %v1163
    %v1165 = vsel %vm753, %v703, 0.0
    %v1166 = vadd.f32 %v1164, %v1165
    %v1167 = vsel %vm753, %v704, 0.0
    %v1168 = vadd.f32 %v1166, %v1167
    %v1169 = vsel %vm753, %v705, 0.0
    %v1170 = vadd.f32 %v1168, %v1169
    %v1171 = vsel %vm753, %v706, 0.0
    %v1172 = vadd.f32 %v1170, %v1171
    %v1173 = vsel %vm753, %v707, 0.0
    %v1174 = vadd.f32 %v1172, %v1173
    %v1175 = vsel %vm753, %v708, 0.0
    %v1176 = vadd.f32 %v1174, %v1175
    %v1177 = vsel %vm753, %v709, 0.0
    %v1178 = vadd.f32 %v1176, %v1177
    %v1179 = vsel %vm753, %v710, 0.0
    %v1180 = vadd.f32 %v1178, %v1179
    %v1181 = vsel %vm753, %v711, 0.0
    %v1182 = vadd.f32 %v1180, %v1181
    %v1183 = vsel %vm753, %v712, 0.0
    %v1184 = vadd.f32 %v1182, %v1183
    %v1185 = vsel %vm753, %v713, 0.0
    %v1186 = vadd.f32 %v1184, %v1185
    %v1187 = vsel %vm753, %v714, 0.0
    %v1188 = vadd.f32 %v1186, %v1187
    %v1189 = vsel %vm753, %v715, 0.0
    %v1190 = vadd.f32 %v1188, %v1189
    %v1191 = vsel %vm753, %v716, 0.0
    %v1192 = vadd.f32 %v1190, %v1191
    %v1193 = vsel %vm753, %v717, 0.0
    %v1194 = vadd.f32 %v1192, %v1193
    %v1195 = vsel %vm753, %v718, 0.0
    %v1196 = vadd.f32 %v1194, %v1195
    %v1197 = vsel %vm753, %v719, 0.0
    %v1198 = vadd.f32 %v1196, %v1197
    %v1199 = vsel %vm753, %v720, 0.0
    %v1200 = vadd.f32 %v1198, %v1199
    %v1201 = vsel %vm753, %v721, 0.0
    %v1202 = vadd.f32 %v1200, %v1201
    %v1203 = vsel %vm753, %v722, 0.0
    %v1204 = vadd.f32 %v1202, %v1203
    %v1205 = vsel %vm753, %v723, 0.0
    %v1206 = vadd.f32 %v1204, %v1205
    %v1207 = vsel %vm753, %v724, 0.0
    %v1208 = vadd.f32 %v1206, %v1207
    %v1209 = vsel %vm753, %v725, 0.0
    %v1210 = vadd.f32 %v1208, %v1209
    %v1211 = vsel %vm753, %v726, 0.0
    %v1212 = vadd.f32 %v1210, %v1211
    %v1213 = vsel %vm753, %v727, 0.0
    %v1214 = vadd.f32 %v1212, %v1213
    %v1215 = vsel %vm753, %v728, 0.0
    %v1216 = vadd.f32 %v1214, %v1215
    %v1217 = vsel %vm753, %v729, 0.0
    %v1218 = vadd.f32 %v1216, %v1217
    %v1219 = vsel %vm753, %v730, 0.0
    %v1220 = vadd.f32 %v1218, %v1219
    %v1221 = vsel %vm753, %v731, 0.0
    %v1222 = vadd.f32 %v1220, %v1221
    %v1223 = vsel %vm753, %v732, 0.0
    %v1224 = vadd.f32 %v1222, %v1223
    %v1225 = vsel %vm753, %v733, 0.0
    %v1226 = vadd.f32 %v1224, %v1225
    %v1227 = vsel %vm753, %v734, 0.0
    %v1228 = vadd.f32 %v1226, %v1227
    %v1229 = vsel %vm753, %v735, 0.0
    %v1230 = vadd.f32 %v1228, %v1229
    %v1231 = vsel %vm753, %v736, 0.0
    %v1232 = vadd.f32 %v1230, %v1231
    %v1233 = vsel %vm753, %v737, 0.0
    %v1234 = vadd.f32 %v1232, %v1233
    %v1235 = vsel %vm753, %v738, 0.0
    %v1236 = vadd.f32 %v1234, %v1235
    %v1237 = vsel %vm753, %v739, 0.0
    %v1238 = vadd.f32 %v1236, %v1237
    %v1239 = vsel %vm753, %v740, 0.0
    %v1240 = vadd.f32 %v1238, %v1239
    %v1241 = vsel %vm753, %v741, 0.0
    %v1242 = vadd.f32 %v1240, %v1241
    %v1243 = vsel %vm753, %v742, 0.0
    %v1244 = vadd.f32 %v1242, %v1243
    %v1245 = vsel %vm753, %v743, 0.0
    %v1246 = vadd.f32 %v1244, %v1245
    %v1247 = vsel %vm753, %v744, 0.0
    %v1248 = vadd.f32 %v1246, %v1247
    %v1249 = vsel %vm753, %v745, 0.0
    %v1250 = vadd.f32 %v1248, %v1249
    %v1251 = vsel %vm753, %v746, 0.0
    %v1252 = vadd.f32 %v1250, %v1251
    %v1253 = vsel %vm753, %v747, 0.0
    %v1254 = vadd.f32 %v1252, %v1253
    %v1255 = vsel %vm753, %v748, 0.0
    %v1256 = vadd.f32 %v1254, %v1255
    %v1257 = vsel %vm753, %v749, 0.0
    %v1258 = vadd.f32 %v1256, %v1257
    %v1259 = vsel %vm753, %v750, 0.0
    %v1260 = vadd.f32 %v1258, %v1259
    %v1261 = vsel %vm753, %v751, 0.0
    %v1262 = vadd.f32 %v1260, %v1261
    %v1263 = vsel %vm753, %v752, 0.0
    %v1264 = vadd.f32 %v1262, %v1263
    %v1265 = vrot.slane %v1264, 4
    %v1266 = vadd.f32 %v1264, %v1265
    %v1267 = vrot.slane %v1266, 2
    %v1268 = vadd.f32 %v1266, %v1267
    %v1269 = vrot.slane %v1268, 1
    %v1270 = vadd.f32 %v1268, %v1269
    %v1271 = vadd.f32 %v496, %v1270
    %vm1272 = vcmask 516096
    %1273 = vst.msk [vmem:[#allocation2] sm:$0x1] %vm1272, %v1271
    // Predicated region
    $region34: #{tpu_custom_call.1} parent=1 // pred_check
      %p1274 = pneg %p56
    $region35: #{tpu_custom_call.1} parent=1 // pred_check_branch
      %1276 = sbr.rel (%p1274) target = $region37
    $region36: #{tpu_custom_call.1} parent=1 // pred_region
      %v1277 = vld [vmem:[#allocation2] sm:$0x1]
      %v1278 = vsel %vm1272, %v1277, 0.0
      %1279 = vadd.xlane.f32.xlu0 %v1278
      %v1280 = vpop.xlane.xlu0 %1279
      %v1281 = vrot.slane %v1280, 4
      %v1282 = vadd.f32 %v1280, %v1281
      %v1283 = vrot.slane %v1282, 2
      %v1284 = vadd.f32 %v1282, %v1283
      %v1285 = vrot.slane %v1284, 1
      %v1286 = vadd.f32 %v1284, %v1285
      %s1287 = vtos %v1286
      %s1288 = smul.f32 %s1287, 0.00048828125
      %s1289 = scalar_lea.smem [#allocation3], 2
      %1290 = sst [smem:[%s1289]] %s1288
    $region37: #{tpu_custom_call.1} parent=1 // pred_fallthru
      _
    // Predicated region
    $region38: #{tpu_custom_call.1} parent=1 // pred_check
      _
    $region39: #{tpu_custom_call.1} parent=1 // pred_check_branch
      %1292 = sbr.rel (0) target = $region41
    $region40: #{tpu_custom_call.1} parent=1 // pred_region
      %s1294 = ssub.s32 16, 16
      %1295 = vsyncadd [#allocation4], %s1294
      %1298 = dma.smem_to_hbm [#allocation3], 16, %s6, [#allocation4]
    $region41: #{tpu_custom_call.1} parent=1 // pred_fallthru
      _
    // Predicated region
    $region42: #{tpu_custom_call.1} parent=1 // pred_check
      _
    $region43: #{tpu_custom_call.1} parent=1 // pred_check_branch
      %1300 = sbr.rel (0) target = $region45
    $region44: #{tpu_custom_call.1} parent=1 // pred_region
      %1301 = dma.done [#allocation4], 16
    $region45: #{tpu_custom_call.1} parent=1 // pred_fallthru
      _
    %1302 = sfence
    %1303 = vsyncpa [#allocation4], 1

</llo_original>
